<compile_context>
chip_gen: v7x
topology: tpu7x:2x2x1
jax: 0.10.0
libtpu: 0.0.40
codegen_flags: <defaults>
</compile_context>

<pallas_src>
import functools

import jax
import jax.numpy as jnp
from jax import lax
from jax.experimental import pallas as pl
from jax.experimental.pallas import tpu as pltpu


def deepnet_kernel(x_ref, w_ref, b_ref, o_ref, *, chunk, n_hidden8, f_hidden):
    """x_ref: (f_in, tb); w_ref: (8, f_in + 8*(n_hidden8+1)); b_ref: (8, n_layers); o_ref: (1, tb)."""
    f_in = x_ref.shape[0]
    tb = x_ref.shape[-1]
    n_chunks = tb // chunk

    # ---- Loop-invariant parameter slabs, hoisted out of the chunk loop ----
    # (JAX does not CSE broadcast_in_dim, so build these exactly once per step.)
    w1_cols = [jnp.broadcast_to(w_ref[:, k:k + 1], (f_hidden, chunk))
               for k in range(f_in)]                                  # layer-1 weight columns
    b_bcast = [jnp.broadcast_to(b_ref[:, l:l + 1], (f_hidden, chunk))
               for l in range(n_hidden8 + 1)]                         # layer-1 + hidden biases
    w_mats = [w_ref[:, f_in + f_hidden * l: f_in + f_hidden * (l + 1)]
              for l in range(n_hidden8 + 1)]                          # (8,8); last = final, zero-padded rows
    b_fin = b_ref[0:1, n_hidden8 + 1: n_hidden8 + 2]                  # (1,1) final bias

    @pl.loop(0, n_chunks)
    def _(c):
        sl = pl.ds(pl.multiple_of(c * chunk, chunk), chunk)

        # Layer 1 (fin=2 -> 8) on the VPU: two broadcast-FMAs + ReLU.
        h = b_bcast[0]
        for k in range(f_in):
            h = h + w1_cols[k] * x_ref[k:k + 1, sl]
        h = jnp.maximum(h, 0.0)                                       # (8, chunk)

        # Hidden layers (8 -> 8) on the MXU.
        for l in range(n_hidden8):
            h = jnp.dot(w_mats[l], h,
                        preferred_element_type=jnp.float32,
                        precision=lax.Precision.HIGHEST)
            h = jnp.maximum(h + b_bcast[l + 1], 0.0)

        # Final layer (8 -> 1), no activation; rows 1..7 of w_mats[-1] are zero.
        y = jnp.dot(w_mats[n_hidden8], h,
                    preferred_element_type=jnp.float32,
                    precision=lax.Precision.HIGHEST)                  # (8, chunk)
        o_ref[0:1, sl] = (y[0:1, :] + b_fin).astype(o_ref.dtype)      # lane-dense store


def deepnet_forward(x, params, *, tb=65536, chunk=512):
    """x: (B, 2) float32.  params: list of (W (f_in, f_out), b (f_out,)) per layer."""
    B, f_in = x.shape
    f_hidden = params[0][0].shape[1]          # 8
    f_out = params[-1][0].shape[1]            # 1
    n_hidden8 = len(params) - 2               # hidden layers with fin == f_hidden

    # Batch tile: multiple of `chunk`, no larger than the chunk-rounded batch
    # (so we never loop over pure padding).  Blocks stay far under the 64 MiB
    # v7x VMEM budget (x: 8*tb bytes, out: 4*tb bytes, double-buffered).
    tb = min(tb, pl.cdiv(B, chunk) * chunk)
    tb = max(chunk, (tb // chunk) * chunk)

    # Pack all weights (as (f_out, f_in)) into one (8, 2 + 8*5) slab and all
    # biases into one (8, 6) slab -> two pinned VMEM blocks, two DMAs total.
    cols = [params[0][0].T.astype(jnp.float32)]                       # (8, 2)
    for w, _ in params[1:-1]:
        cols.append(w.T.astype(jnp.float32))                          # (8, 8)
    wf = params[-1][0].T.astype(jnp.float32)                          # (1, 8)
    cols.append(jnp.zeros((f_hidden, f_hidden), jnp.float32).at[:f_out, :].set(wf))
    w_packed = jnp.concatenate(cols, axis=1)                          # (8, 42)

    b_packed = jnp.stack(
        [jnp.zeros((f_hidden,), jnp.float32).at[:b.shape[0]].set(b) for _, b in params],
        axis=1)                                                       # (8, 6)

    # Feature-major view of x (batch on lanes).  This transpose is the only
    # remaining wrapper-side HBM copy; feeding feature-major (2, B) data from
    # upstream removes it entirely.
    xt = x.T                                                          # (2, B)

    kernel = functools.partial(
        deepnet_kernel, chunk=chunk, n_hidden8=n_hidden8, f_hidden=f_hidden)

    out = pl.pallas_call(
        kernel,
        out_shape=jax.ShapeDtypeStruct((f_out, B), x.dtype),
        grid_spec=pltpu.PrefetchScalarGridSpec(
            num_scalar_prefetch=0,
            grid=(pl.cdiv(B, tb),),                                   # ragged last block OK (no pad copy)
            in_specs=[
                pl.BlockSpec((f_in, tb), lambda i: (0, i)),           # lane-dense x tile
                pl.BlockSpec(w_packed.shape, lambda i: (0, 0)),       # resident params
                pl.BlockSpec(b_packed.shape, lambda i: (0, 0)),
            ],
            out_specs=pl.BlockSpec((f_out, tb), lambda i: (0, i)),    # lane-dense store
        ),
        compiler_params=pltpu.CompilerParams(
            dimension_semantics=("parallel",)),                       # megacore-shardable
    )(xt, w_packed, b_packed)
    return out.T                                                      # (B, 1)


def init_params(key):
    """Deterministic init mimicking nn.Linear's default U(-1/sqrt(fan_in), 1/sqrt(fan_in))."""
    def linear(k, fin, fout):
        kw, kb = jax.random.split(k)
        bound = 1.0 / (fin ** 0.5)
        w = jax.random.uniform(kw, (fin, fout), jnp.float32, -bound, bound)
        b = jax.random.uniform(kb, (fout,), jnp.float32, -bound, bound)
        return w, b

    keys = jax.random.split(key, 6)
    params = [linear(keys[0], 2, 8)]
    for i in range(1, 5):
        params.append(linear(keys[i], 8, 8))
    params.append(linear(keys[5], 8, 1))
    return params


def deepnet_reference(x, params):
    h = x
    for w, b in params[:-1]:
        h = jnp.maximum(jnp.dot(h, w, precision=lax.Precision.HIGHEST) + b, 0.0)
    wf, bf = params[-1]
    return jnp.dot(h, wf, precision=lax.Precision.HIGHEST) + bf


if __name__ == "__main__":
    key = jax.random.PRNGKey(0)
    k_x, k_p = jax.random.split(key)
    params = init_params(k_p)

    # Small demo: 4 parallel grid steps x 2 in-kernel chunks per step.
    B = 2048
    x = jax.random.normal(k_x, (B, 2), dtype=jnp.float32)
    out = jax.block_until_ready(deepnet_forward(x, params, tb=512, chunk=256))
    ref = deepnet_reference(x, params)
    assert out.shape == (B, 1)
    assert jnp.allclose(out, ref, atol=1e-4, rtol=1e-4), "mismatch vs JAX reference"

    # Ragged batch (not a multiple of the tile): exercises the padding-free
    # non-divisible grid and the clipped last-block writeback.
    B2 = 777
    x2 = jax.random.normal(k_x, (B2, 2), dtype=jnp.float32)
    out2 = jax.block_until_ready(deepnet_forward(x2, params, tb=512, chunk=256))
    ref2 = deepnet_reference(x2, params)
    assert out2.shape == (B2, 1)
    assert jnp.allclose(out2, ref2, atol=1e-4, rtol=1e-4), "mismatch (ragged batch)"

    print("KERNEL_OK")
</pallas_src>

<mosaic_0001>
module attributes {stable_mosaic.version = 11 : i64} {
  func.func @deepnet_kernel(%arg0: i32, %arg1: memref<2x512xf32, #tpu.memory_space<vmem>>, %arg2: memref<8x42xf32, #tpu.memory_space<vmem>>, %arg3: memref<8x6xf32, #tpu.memory_space<vmem>>, %arg4: memref<1x512xf32, #tpu.memory_space<vmem>>) attributes {dimension_semantics = [#tpu.dimension_semantics<parallel>], iteration_bounds = array<i64: 4>, scalar_prefetch = 0 : i64, scratch_operands = 0 : i64, tpu.core_type = #tpu.core_type<tc>, window_params = [{transform_indices = @transform_0, window_bounds = array<i64: 2, 512>}, {pipeline_mode = #tpu.pipeline_mode<synchronous>, transform_indices = @transform_1, window_bounds = array<i64: 8, 42>}, {pipeline_mode = #tpu.pipeline_mode<synchronous>, transform_indices = @transform_2, window_bounds = array<i64: 8, 6>}, {transform_indices = @transform_3, window_bounds = array<i64: 1, 512>}]} {
    %c0 = arith.constant 0 : index
    %c0_0 = arith.constant 0 : index
    %0 = vector.load %arg2[%c0, %c0_0] : memref<8x42xf32, #tpu.memory_space<vmem>>, vector<8x1xf32>
    %1 = vector.shape_cast %0 : vector<8x1xf32> to vector<8x1xf32>
    %2 = vector.broadcast %1 : vector<8x1xf32> to vector<8x256xf32>
    %c0_1 = arith.constant 0 : index
    %c1 = arith.constant 1 : index
    %3 = vector.load %arg2[%c0_1, %c1] : memref<8x42xf32, #tpu.memory_space<vmem>>, vector<8x1xf32>
    %4 = vector.shape_cast %3 : vector<8x1xf32> to vector<8x1xf32>
    %5 = vector.broadcast %4 : vector<8x1xf32> to vector<8x256xf32>
    %c0_2 = arith.constant 0 : index
    %c0_3 = arith.constant 0 : index
    %6 = vector.load %arg3[%c0_2, %c0_3] : memref<8x6xf32, #tpu.memory_space<vmem>>, vector<8x1xf32>
    %7 = vector.shape_cast %6 : vector<8x1xf32> to vector<8x1xf32>
    %8 = vector.broadcast %7 : vector<8x1xf32> to vector<8x256xf32>
    %c0_4 = arith.constant 0 : index
    %c1_5 = arith.constant 1 : index
    %9 = vector.load %arg3[%c0_4, %c1_5] : memref<8x6xf32, #tpu.memory_space<vmem>>, vector<8x1xf32>
    %10 = vector.shape_cast %9 : vector<8x1xf32> to vector<8x1xf32>
    %11 = vector.broadcast %10 : vector<8x1xf32> to vector<8x256xf32>
    %c0_6 = arith.constant 0 : index
    %c2 = arith.constant 2 : index
    %12 = vector.load %arg3[%c0_6, %c2] : memref<8x6xf32, #tpu.memory_space<vmem>>, vector<8x1xf32>
    %13 = vector.shape_cast %12 : vector<8x1xf32> to vector<8x1xf32>
    %14 = vector.broadcast %13 : vector<8x1xf32> to vector<8x256xf32>
    %c0_7 = arith.constant 0 : index
    %c3 = arith.constant 3 : index
    %15 = vector.load %arg3[%c0_7, %c3] : memref<8x6xf32, #tpu.memory_space<vmem>>, vector<8x1xf32>
    %16 = vector.shape_cast %15 : vector<8x1xf32> to vector<8x1xf32>
    %17 = vector.broadcast %16 : vector<8x1xf32> to vector<8x256xf32>
    %c0_8 = arith.constant 0 : index
    %c4 = arith.constant 4 : index
    %18 = vector.load %arg3[%c0_8, %c4] : memref<8x6xf32, #tpu.memory_space<vmem>>, vector<8x1xf32>
    %19 = vector.shape_cast %18 : vector<8x1xf32> to vector<8x1xf32>
    %20 = vector.broadcast %19 : vector<8x1xf32> to vector<8x256xf32>
    %c0_9 = arith.constant 0 : index
    %c2_10 = arith.constant 2 : index
    %21 = vector.load %arg2[%c0_9, %c2_10] : memref<8x42xf32, #tpu.memory_space<vmem>>, vector<8x8xf32>
    %c0_11 = arith.constant 0 : index
    %c10 = arith.constant 10 : index
    %22 = vector.load %arg2[%c0_11, %c10] : memref<8x42xf32, #tpu.memory_space<vmem>>, vector<8x8xf32>
    %c0_12 = arith.constant 0 : index
    %c18 = arith.constant 18 : index
    %23 = vector.load %arg2[%c0_12, %c18] : memref<8x42xf32, #tpu.memory_space<vmem>>, vector<8x8xf32>
    %c0_13 = arith.constant 0 : index
    %c26 = arith.constant 26 : index
    %24 = vector.load %arg2[%c0_13, %c26] : memref<8x42xf32, #tpu.memory_space<vmem>>, vector<8x8xf32>
    %c0_14 = arith.constant 0 : index
    %c34 = arith.constant 34 : index
    %25 = vector.load %arg2[%c0_14, %c34] : memref<8x42xf32, #tpu.memory_space<vmem>>, vector<8x8xf32>
    %c0_15 = arith.constant 0 : index
    %c5 = arith.constant 5 : index
    %26 = vector.load %arg3[%c0_15, %c5] : memref<8x6xf32, #tpu.memory_space<vmem>>, vector<1x1xf32>
    %c0_i32 = arith.constant 0 : i32
    %c2_i32 = arith.constant 2 : i32
    %27 = arith.addi %c0_i32, %c2_i32 : i32
    %c1_i32 = arith.constant 1 : i32
    scf.for %arg5 = %c0_i32 to %27 step %c1_i32  : i32 {
      %c1_i32_17 = arith.constant 1 : i32
      %28 = arith.muli %arg5, %c1_i32_17 : i32
      %c0_i32_18 = arith.constant 0 : i32
      %29 = arith.addi %c0_i32_18, %28 : i32
      %c256_i32 = arith.constant 256 : i32
      %30 = arith.muli %29, %c256_i32 : i32
      %31 = tpu.assume_multiple %30, 256 : i32
      %c0_19 = arith.constant 0 : index
      %32 = arith.index_cast %31 : i32 to index
      %33 = vector.load %arg1[%c0_19, %32] : memref<2x512xf32, #tpu.memory_space<vmem>>, vector<1x256xf32>
      %34 = vector.broadcast %33 : vector<1x256xf32> to vector<8x256xf32>
      %35 = arith.mulf %2, %34 : vector<8x256xf32>
      %36 = arith.addf %8, %35 : vector<8x256xf32>
      %c1_20 = arith.constant 1 : index
      %37 = arith.index_cast %31 : i32 to index
      %38 = vector.load %arg1[%c1_20, %37] : memref<2x512xf32, #tpu.memory_space<vmem>>, vector<1x256xf32>
      %39 = vector.broadcast %38 : vector<1x256xf32> to vector<8x256xf32>
      %40 = arith.mulf %5, %39 : vector<8x256xf32>
      %41 = arith.addf %36, %40 : vector<8x256xf32>
      %cst = arith.constant 0.000000e+00 : f32
      %42 = vector.broadcast %cst : f32 to vector<8x256xf32>
      %43 = arith.maximumf %41, %42 : vector<8x256xf32>
      %cst_21 = arith.constant dense<0.000000e+00> : vector<8x256xf32>
      %44 = tpu.matmul %21, %43, %cst_21 {dimension_numbers = #tpu.dot_dimension_numbers<[1], [0], [0], [1], [0, 0, 1, 1], [], []>, precision = #tpu.contract_precision<fp32>} : vector<8x8xf32>, vector<8x256xf32>, vector<8x256xf32> -> vector<8x256xf32>
      %45 = arith.addf %44, %11 : vector<8x256xf32>
      %cst_22 = arith.constant 0.000000e+00 : f32
      %46 = vector.broadcast %cst_22 : f32 to vector<8x256xf32>
      %47 = arith.maximumf %45, %46 : vector<8x256xf32>
      %cst_23 = arith.constant dense<0.000000e+00> : vector<8x256xf32>
      %48 = tpu.matmul %22, %47, %cst_23 {dimension_numbers = #tpu.dot_dimension_numbers<[1], [0], [0], [1], [0, 0, 1, 1], [], []>, precision = #tpu.contract_precision<fp32>} : vector<8x8xf32>, vector<8x256xf32>, vector<8x256xf32> -> vector<8x256xf32>
      %49 = arith.addf %48, %14 : vector<8x256xf32>
      %cst_24 = arith.constant 0.000000e+00 : f32
      %50 = vector.broadcast %cst_24 : f32 to vector<8x256xf32>
      %51 = arith.maximumf %49, %50 : vector<8x256xf32>
      %cst_25 = arith.constant dense<0.000000e+00> : vector<8x256xf32>
      %52 = tpu.matmul %23, %51, %cst_25 {dimension_numbers = #tpu.dot_dimension_numbers<[1], [0], [0], [1], [0, 0, 1, 1], [], []>, precision = #tpu.contract_precision<fp32>} : vector<8x8xf32>, vector<8x256xf32>, vector<8x256xf32> -> vector<8x256xf32>
      %53 = arith.addf %52, %17 : vector<8x256xf32>
      %cst_26 = arith.constant 0.000000e+00 : f32
      %54 = vector.broadcast %cst_26 : f32 to vector<8x256xf32>
      %55 = arith.maximumf %53, %54 : vector<8x256xf32>
      %cst_27 = arith.constant dense<0.000000e+00> : vector<8x256xf32>
      %56 = tpu.matmul %24, %55, %cst_27 {dimension_numbers = #tpu.dot_dimension_numbers<[1], [0], [0], [1], [0, 0, 1, 1], [], []>, precision = #tpu.contract_precision<fp32>} : vector<8x8xf32>, vector<8x256xf32>, vector<8x256xf32> -> vector<8x256xf32>
      %57 = arith.addf %56, %20 : vector<8x256xf32>
      %cst_28 = arith.constant 0.000000e+00 : f32
      %58 = vector.broadcast %cst_28 : f32 to vector<8x256xf32>
      %59 = arith.maximumf %57, %58 : vector<8x256xf32>
      %cst_29 = arith.constant dense<0.000000e+00> : vector<8x256xf32>
      %60 = tpu.matmul %25, %59, %cst_29 {dimension_numbers = #tpu.dot_dimension_numbers<[1], [0], [0], [1], [0, 0, 1, 1], [], []>, precision = #tpu.contract_precision<fp32>} : vector<8x8xf32>, vector<8x256xf32>, vector<8x256xf32> -> vector<8x256xf32>
      %61 = vector.extract_strided_slice %60 {offsets = [0, 0], sizes = [1, 256], strides = [1, 1]} : vector<8x256xf32> to vector<1x256xf32>
      %62 = vector.broadcast %26 : vector<1x1xf32> to vector<1x256xf32>
      %63 = arith.addf %61, %62 : vector<1x256xf32>
      %c0_30 = arith.constant 0 : index
      %64 = arith.index_cast %31 : i32 to index
      %65 = vector.load %arg4[%c0_30, %64] : memref<1x512xf32, #tpu.memory_space<vmem>>, vector<1x256xf32>
      tpu.vector_store %arg4[%c0_30, %64], %63 {strides = array<i32>} : memref<1x512xf32, #tpu.memory_space<vmem>>, vector<1x256xf32>,
    }
    %c2_i32_16 = arith.constant 2 : i32
    return
  }
  func.func @transform_0(%arg0: i32) -> (i32, i32) {
    %c0_i32 = arith.constant 0 : i32
    %c0_i32_0 = arith.constant 0 : i32
    return %c0_i32, %arg0 : i32, i32
  }
  func.func @transform_1(%arg0: i32) -> (i32, i32) {
    %c0_i32 = arith.constant 0 : i32
    %c0_i32_0 = arith.constant 0 : i32
    %c0_i32_1 = arith.constant 0 : i32
    return %c0_i32, %c0_i32_0 : i32, i32
  }
  func.func @transform_2(%arg0: i32) -> (i32, i32) {
    %c0_i32 = arith.constant 0 : i32
    %c0_i32_0 = arith.constant 0 : i32
    %c0_i32_1 = arith.constant 0 : i32
    return %c0_i32, %c0_i32_0 : i32, i32
  }
  func.func @transform_3(%arg0: i32) -> (i32, i32) {
    %c0_i32 = arith.constant 0 : i32
    %c0_i32_0 = arith.constant 0 : i32
    return %c0_i32, %arg0 : i32, i32
  }
}

</mosaic_0001>

<llo_original>
// kernel: tpu_custom_call.1
$region0: #{tpu_custom_call.1}
  #allocation0 [shape = 'u32[]', space=smem, size = 0x4, offset = 0x4, fixed_abs, tag = 'smem constant byte address 0x4 - core index']
  #allocation1 [shape = 'u32[144,128]{1,0:T(1,128)}', space=vmem, size = 0x12000, scoped, tag = 'internal scratch']
  %s0 = inlined_call_operand.hbm [shape: f32[2,2048], index: 0, kind: input, shape index: {}]
  %s1 = inlined_call_operand.hbm [shape: f32[8,42], index: 1, kind: input, shape index: {}]
  %s2 = inlined_call_operand.hbm [shape: f32[8,6], index: 2, kind: input, shape index: {}]
  %s3 = inlined_call_operand.hbm [shape: f32[1,2048], index: 3, kind: output, shape index: {}]
  %s4 = sld [smem:[#allocation0]]
  $region64: #{tpu_custom_call.1} parent=0
    _
  %s6 = ssub.s32 1, %s4
  %s7 = scalar_select 0, %s6, %s4
  $region1: #{tpu_custom_call.1} parent=0
    #allocation2 [shape = 'u8[8192]{0}', space=vmem, size = 0x2000, scoped, tag = 'input window, operand 0']
    #allocation3 [shape = 's32[2]{0}', space=sflag, size = 0x8, scoped, tag = 'scoped memory for tpu_custom_call.1']
    #allocation4 [shape = 's32[2]{0}', space=sflag, size = 0x8, scoped, tag = 'scoped memory for tpu_custom_call.1']
    #allocation5 [shape = 'u8[4096]{0}', space=vmem, size = 0x1000, scoped, tag = 'input window, operand 1, single buffered']
    #allocation6 [shape = 's32[1]{0}', space=sflag, size = 0x4, scoped, tag = 'scoped memory for tpu_custom_call.1']
    #allocation7 [shape = 'u8[4096]{0}', space=vmem, size = 0x1000, scoped, tag = 'input window, operand 2, single buffered']
    #allocation8 [shape = 'u8[4096]{0}', space=vmem, size = 0x1000, scoped, tag = 'output window, operand 0']
    %8 = vsyncpa [#allocation3], 0
    %s9 = scalar_lea.sflag [#allocation3], 1
    %10 = vsyncpa %s9, 0
    %11 = vsyncpa [#allocation6], 0
    %12 = vsyncpa [#allocation4], 0
    %s13 = scalar_lea.sflag [#allocation4], 1
    %14 = vsyncpa %s13, 0
    loop: start=0, step=1, limit=6
    $region2: #{tpu_custom_call.1} parent=1 // loop_pre_header
      _
    $region3: #{tpu_custom_call.1} parent=1 // loop_header
      %s16 = sphi 0, %s20
      %p17 = scmp.ge.s32.totalorder %s16, 6
      %s26 = sphi 0, %s28
      %s29 = sphi 0, %s26
      %s30 = sphi 0, %s29
      %s46 = sphi 0, %s30
      %s50 = sphi 0, %s50
      %s52 = sphi 0, %s50
      %s53 = sphi 0, %s52
      %s67 = sphi 0, %s53
      %s71 = sphi 0, %s71
      %s73 = sphi 0, %s71
      %s74 = sphi 0, %s73
      %s88 = sphi 0, %s74
      %s94 = sphi 0, %s96
      %s97 = sphi 0, %s94
      %s98 = sphi 0, %s97
      %s114 = sphi 0, %s98
    $region4: #{tpu_custom_call.1} parent=1 // loop_header_branch
      %19 = sbr.rel (%p17) target = $region8
    $region5: #{tpu_custom_call.1} parent=1 // loop_body
      %s21 = ssub.s32 %s16, 1
      %s22 = ssub.s32 %s16, 2
      %s23 = sadd.s32 %s16, 1
      %s24 = ssub.s32 %s16, %s23
      %p25 = scmp.eq.s32.totalorder %s24, 0
      %s27 = sadd.s32 %s26, 1
      %s28 = scalar_select %p25, %s26, %s27
      %p31 = pneg %p25
      %p32 = scmp.eq.s32.totalorder %s16, 3
      %p33 = por %p31, %p32
      %p34 = scmp.ne.s32.totalorder %s26, %s29
      %p35 = scmp.eq.s32.totalorder %s16, 0
      %p36 = por %p34, %p35
      %p37 = scmp.ne.s32.totalorder %s26, %s29
      %p38 = scmp.eq.s32.totalorder %s21, 3
      %p39 = por %p37, %p38
      %p40 = scmp.ne.s32.totalorder %s29, %s30
      %p41 = scmp.eq.s32.totalorder %s21, 0
      %p42 = por %p40, %p41
      %p43 = scmp.ne.s32.totalorder %s29, %s30
      %p44 = scmp.eq.s32.totalorder %s22, 3
      %p45 = por %p43, %p44
      %p47 = scmp.ne.s32.totalorder %s30, %s46
      %p48 = scmp.eq.s32.totalorder %s22, 0
      %p49 = por %p47, %p48
      %s51 = sadd.s32 %s50, 1
      %p54 = scmp.eq.s32.totalorder %s16, 3
      %p55 = scmp.ne.s32.totalorder %s50, %s52
      %p56 = scmp.eq.s32.totalorder %s16, 0
      %p57 = por %p55, %p56
      %p58 = scmp.ne.s32.totalorder %s50, %s52
      %p59 = scmp.eq.s32.totalorder %s21, 3
      %p60 = por %p58, %p59
      %p61 = scmp.ne.s32.totalorder %s52, %s53
      %p62 = scmp.eq.s32.totalorder %s21, 0
      %p63 = por %p61, %p62
      %p64 = scmp.ne.s32.totalorder %s52, %s53
      %p65 = scmp.eq.s32.totalorder %s22, 3
      %p66 = por %p64, %p65
      %p68 = scmp.ne.s32.totalorder %s53, %s67
      %p69 = scmp.eq.s32.totalorder %s22, 0
      %p70 = por %p68, %p69
      %s72 = sadd.s32 %s71, 1
      %p75 = scmp.eq.s32.totalorder %s16, 3
      %p76 = scmp.ne.s32.totalorder %s71, %s73
      %p77 = scmp.eq.s32.totalorder %s16, 0
      %p78 = por %p76, %p77
      %p79 = scmp.ne.s32.totalorder %s71, %s73
      %p80 = scmp.eq.s32.totalorder %s21, 3
      %p81 = por %p79, %p80
      %p82 = scmp.ne.s32.totalorder %s73, %s74
      %p83 = scmp.eq.s32.totalorder %s21, 0
      %p84 = por %p82, %p83
      %p85 = scmp.ne.s32.totalorder %s73, %s74
      %p86 = scmp.eq.s32.totalorder %s22, 3
      %p87 = por %p85, %p86
      %p89 = scmp.ne.s32.totalorder %s74, %s88
      %p90 = scmp.eq.s32.totalorder %s22, 0
      %p91 = por %p89, %p90
      %s92 = ssub.s32 %s16, %s23
      %p93 = scmp.eq.s32.totalorder %s92, 0
      %s95 = sadd.s32 %s94, 1
      %s96 = scalar_select %p93, %s94, %s95
      %p99 = pneg %p93
      %p100 = scmp.eq.s32.totalorder %s16, 3
      %p101 = por %p99, %p100
      %p102 = scmp.ne.s32.totalorder %s94, %s97
      %p103 = scmp.eq.s32.totalorder %s16, 0
      %p104 = por %p102, %p103
      %p105 = scmp.ne.s32.totalorder %s94, %s97
      %p106 = scmp.eq.s32.totalorder %s21, 3
      %p107 = por %p105, %p106
      %p108 = scmp.ne.s32.totalorder %s97, %s98
      %p109 = scmp.eq.s32.totalorder %s21, 0
      %p110 = por %p108, %p109
      %p111 = scmp.ne.s32.totalorder %s97, %s98
      %p112 = scmp.eq.s32.totalorder %s22, 3
      %p113 = por %p111, %p112
      %p115 = scmp.ne.s32.totalorder %s98, %s114
      %p116 = scmp.eq.s32.totalorder %s22, 0
      %p117 = por %p115, %p116
      %p118 = scmp.le.s32.totalorder 1, %s16
      %p119 = scmp.lt.s32.totalorder %s16, 5
      %p120 = pnand %p118, %p119
      %p121 = pneg %p120
      // Predicated region
      $region9: #{tpu_custom_call.1} parent=5 // pred_check
        _
      $region10: #{tpu_custom_call.1} parent=5 // pred_check_branch
        %123 = sbr.rel (%p120) target = $region12
      $region11: #{tpu_custom_call.1} parent=5 // pred_region
        %s124 = ssub.s32 %s16, 1
        // Predicated region
        $region13: #{tpu_custom_call.1} parent=11 // pred_check
          %p125 = pneg %p63
        $region14: #{tpu_custom_call.1} parent=11 // pred_check_branch
          %127 = sbr.rel (%p125) target = $region16
        $region15: #{tpu_custom_call.1} parent=11 // pred_region
          %s129 = ssub.s32 128, 128
          %130 = vsyncadd [#allocation6], %s129
          %s132 = sshll.u32 [#allocation5], 4
          %s133 = int_to_ptr.vmem [resolvable:$true] %s132
          %135 = dma.hbm_to_vmem [thread:$0]  %s1, 128, %s133, [#allocation6]
        $region16: #{tpu_custom_call.1} parent=11 // pred_fallthru
          _
        // Predicated region
        $region17: #{tpu_custom_call.1} parent=11 // pred_check
          %p136 = pneg %p84
        $region18: #{tpu_custom_call.1} parent=11 // pred_check_branch
          %138 = sbr.rel (%p136) target = $region20
        $region19: #{tpu_custom_call.1} parent=11 // pred_region
          %s140 = ssub.s32 128, 128
          %141 = vsyncadd [#allocation6], %s140
          %s143 = sshll.u32 [#allocation7], 4
          %s144 = int_to_ptr.vmem [resolvable:$true] %s143
          %146 = dma.hbm_to_vmem [thread:$0]  %s2, 128, %s144, [#allocation6]
        $region20: #{tpu_custom_call.1} parent=11 // pred_fallthru
          _
      $region12: #{tpu_custom_call.1} parent=5 // pred_fallthru
        _
      %p147 = scmp.lt.s32.totalorder %s16, 4
      // Predicated region
      $region21: #{tpu_custom_call.1} parent=5 // pred_check
        %p148 = pneg %p147
      $region22: #{tpu_custom_call.1} parent=5 // pred_check_branch
        %150 = sbr.rel (%p148) target = $region24
      $region23: #{tpu_custom_call.1} parent=5 // pred_region
        // Predicated region
        $region25: #{tpu_custom_call.1} parent=23 // pred_check
          %p151 = pneg %p36
        $region26: #{tpu_custom_call.1} parent=23 // pred_check_branch
          %153 = sbr.rel (%p151) target = $region28
        $region27: #{tpu_custom_call.1} parent=23 // pred_region
          %s154 = sand.u32 %s26, 1
          %s155 = scalar_lea.sflag [#allocation3], %s154
          %s156 = sand.u32 %s26, 1
          %s157 = smul.addr %s156, 8
          %s158 = scalar_lea.vmem [#allocation2], %s157
          %s159 = smul.u32 4, %s16
          %s161 = ssub.s32 128, 128
          %162 = vsyncadd %s155, %s161
          %s163 = smul.addr %s159, 32
          %s164 = scalar_lea.hbm %s0, %s163
          %s166 = sshll.u32 %s158, 4
          %s167 = int_to_ptr.vmem [resolvable:$true] %s166
          %169 = dma.hbm_to_vmem [thread:$0]  %s164, 128, %s167, %s155
        $region28: #{tpu_custom_call.1} parent=23 // pred_fallthru
          _
      $region24: #{tpu_custom_call.1} parent=5 // pred_fallthru
        _
      %p170 = scmp.le.s32.totalorder 1, %s16
      %p171 = scmp.lt.s32.totalorder %s16, 5
      %p172 = pnand %p170, %p171
      %p173 = pneg %p172
      // Predicated region
      $region29: #{tpu_custom_call.1} parent=5 // pred_check
        _
      $region30: #{tpu_custom_call.1} parent=5 // pred_check_branch
        %175 = sbr.rel (%p172) target = $region32
      $region31: #{tpu_custom_call.1} parent=5 // pred_region
        %s176 = ssub.s32 %s16, 1
        %s177 = sand.u32 %s29, 1
        %s178 = scalar_lea.sflag [#allocation3], %s177
        %s179 = sand.u32 %s29, 1
        %s180 = smul.addr %s179, 8
        %s181 = scalar_lea.vmem [#allocation2], %s180
        // Predicated region
        $region33: #{tpu_custom_call.1} parent=31 // pred_check
          %p182 = pneg %p42
        $region34: #{tpu_custom_call.1} parent=31 // pred_check_branch
          %184 = sbr.rel (%p182) target = $region36
        $region35: #{tpu_custom_call.1} parent=31 // pred_region
          %185 = dma.done %s178, 128
        $region36: #{tpu_custom_call.1} parent=31 // pred_fallthru
          _
        // Predicated region
        $region37: #{tpu_custom_call.1} parent=31 // pred_check
          %p186 = pneg %p63
        $region38: #{tpu_custom_call.1} parent=31 // pred_check_branch
          %188 = sbr.rel (%p186) target = $region40
        $region39: #{tpu_custom_call.1} parent=31 // pred_region
          %189 = dma.done [#allocation6], 128
        $region40: #{tpu_custom_call.1} parent=31 // pred_fallthru
          _
        // Predicated region
        $region41: #{tpu_custom_call.1} parent=31 // pred_check
          %p190 = pneg %p84
        $region42: #{tpu_custom_call.1} parent=31 // pred_check_branch
          %192 = sbr.rel (%p190) target = $region44
        $region43: #{tpu_custom_call.1} parent=31 // pred_region
          %193 = dma.done [#allocation6], 128
        $region44: #{tpu_custom_call.1} parent=31 // pred_fallthru
          _
        %s194 = sand.u32 %s29, 1
        %s195 = scalar_lea.sflag [#allocation3], %s194
        %s196 = sand.u32 %s29, 1
        %s197 = smul.addr %s196, 8
        %s198 = scalar_lea.vmem [#allocation2], %s197
        %p199 = pneg %p42
        %p200 = pneg %p39
        %p201 = pneg %p63
        %p202 = pneg %p60
        %p203 = pneg %p84
        %p204 = pneg %p81
        %p205 = pneg %p110
        %p206 = pneg %p107
        %s207 = sand.u32 %s97, 1
        %s208 = scalar_lea.sflag [#allocation4], %s207
        %s209 = sand.u32 %s97, 1
        %s210 = smul.addr %s209, 4
        %s211 = scalar_lea.vmem [#allocation8], %s210
        %s212 = smul.u32 4, %s21
        %s213 = smul.u32 4, %s21
        %v214 = vld [vmem:[#allocation5] sm:$0xff]
        %216 = vset.pattern.permute.xlu0 0
        %217 = vperm.xlu0 %216, %v214
        %v218 = vpop.permute.xlu0 %217
        %220 = vset.pattern.permute.xlu0 1
        %221 = vperm.xlu0 %220, %v214
        %v222 = vpop.permute.xlu0 %221
        %v224 = vld [vmem:[#allocation7] sm:$0xff]
        %226 = vset.pattern.permute.xlu0 0
        %227 = vperm.xlu0 %226, %v224
        %v228 = vpop.permute.xlu0 %227
        %230 = vset.pattern.permute.xlu0 1
        %231 = vperm.xlu0 %230, %v224
        %v232 = vpop.permute.xlu0 %231
        %234 = vset.pattern.permute.xlu0 2
        %235 = vperm.xlu0 %234, %v224
        %v236 = vpop.permute.xlu0 %235
        %238 = vset.pattern.permute.xlu0 3
        %239 = vperm.xlu0 %238, %v224
        %v240 = vpop.permute.xlu0 %239
        %242 = vset.pattern.permute.xlu0 4
        %243 = vperm.xlu0 %242, %v224
        %v244 = vpop.permute.xlu0 %243
        %v246 = vld [vmem:[#allocation7] sm:$0x1]
        loop: start=0, step=1, limit=2
        $region45: #{tpu_custom_call.1} parent=31 // loop_pre_header
          _
        $region46: #{tpu_custom_call.1} parent=31 // loop_header
          %s248 = sphi 0, %s252
          %p249 = scmp.ge.s32.totalorder %s248, 2
        $region47: #{tpu_custom_call.1} parent=31 // loop_header_branch
          %251 = sbr.rel (%p249) target = $region51
        $region48: #{tpu_custom_call.1} parent=31 // loop_body
          %s253 = smul.u32 %s248, 256
          %s254 = sshra.s32 %s253, 7
          %s255 = sand.u32 %s253, 127
          %s256 = smul.addr %s254, 2
          %s257 = scalar_lea.vmem %s181, %s256 [#allocation2]
          %v258 = vld [vmem:[%s257] ss:$2 sm:$0x3]
          %v260 = vlaneseq
          %v261 = vshrl.u32 %v260, 7
          %v262 = vsub.s32 0, %v261
          %v263 = vrot.slane %v258, %v262
          %v264 = vlaneseq
          %v265 = vshrl.u32 %v264, 7
          %v266 = vsub.s32 1, %v265
          %v267 = vrot.slane %v258, %v266
          %v270 = vmul.f32 %v218, %v263
          %v271 = vmul.f32 %v218, %v267
          %v272 = vadd.f32 %v228, %v270
          %v273 = vadd.f32 %v228, %v271
          %s274 = scalar_lea.vmem %s257, 1 [#allocation2]
          %v275 = vld [vmem:[%s274] ss:$2 sm:$0x3]
          %v277 = vlaneseq
          %v278 = vshrl.u32 %v277, 7
          %v279 = vsub.s32 0, %v278
          %v280 = vrot.slane %v275, %v279
          %v281 = vlaneseq
          %v282 = vshrl.u32 %v281, 7
          %v283 = vsub.s32 1, %v282
          %v284 = vrot.slane %v275, %v283
          %v287 = vmul.f32 %v222, %v280
          %v288 = vmul.f32 %v222, %v284
          %v289 = vadd.f32 %v272, %v287
          %v290 = vadd.f32 %v273, %v288
          %v291 = vmax.f32 %v289, 0.0
          %v292 = vmax.f32 %v290, 0.0
          %293 = vrot.lane.b32.xlu0 %v214, 126
          %v294 = vpop.permute.xlu0 %293
          %vm295 = vcmask 64512
          %v296 = vsel %vm295, %v294, 0
          %v298 = vand.u32 %v292, 4294901760
          %299 = vmatprep.subr.mxu0 %v298
          %v300 = vand.u32 %v291, 4294901760
          %301 = vmatpush1.msra.mxu0 %v300
          %302 = vmatprep.subr.mxu0 0.0
          %303 = vmatpush1.msra.mxu0 0.0
          %304 = vmatprep.subr.mxu0 0.0
          %305 = vmatpush1.msra.mxu0 0.0
          %306 = vmatprep.subr.mxu0 0.0
          %307 = vmatpush1.msra.mxu0 0.0
          %308 = vmatprep.subr.mxu0 0.0
          %309 = vmatpush1.msra.mxu0 0.0
          %310 = vmatprep.subr.mxu0 0.0
          %311 = vmatpush1.msra.mxu0 0.0
          %312 = vmatprep.subr.mxu0 0.0
          %313 = vmatpush1.msra.mxu0 0.0
          %314 = vmatprep.subr.mxu0 0.0
          %315 = vmatpush1.msra.mxu0 0.0
          %316 = vmatprep.subr.mxu0 0.0
          %317 = vmatpush1.msra.mxu0 0.0
          %318 = vmatprep.subr.mxu0 0.0
          %319 = vmatpush1.msra.mxu0 0.0
          %320 = vmatprep.subr.mxu0 0.0
          %321 = vmatpush1.msra.mxu0 0.0
          %322 = vmatprep.subr.mxu0 0.0
          %323 = vmatpush1.msra.mxu0 0.0
          %324 = vmatprep.subr.mxu0 0.0
          %325 = vmatpush1.msra.mxu0 0.0
          %326 = vmatprep.subr.mxu0 0.0
          %327 = vmatpush1.msra.mxu0 0.0
          %328 = vmatprep.subr.mxu0 0.0
          %329 = vmatpush1.msra.mxu0 0.0
          %330 = vmatprep.subr.mxu0 0.0
          %331 = vmatpush1.msra.mxu0 0.0
          %332 = vmatprep.subr.mxu0 0.0
          %333 = vmatpush1.msra.mxu0 0.0
          %334 = vmatprep.subr.mxu0 0.0
          %335 = vmatpush1.msra.mxu0 0.0
          %336 = vmatprep.subr.mxu0 0.0
          %337 = vmatpush1.msra.mxu0 0.0
          %338 = vmatprep.subr.mxu0 0.0
          %339 = vmatpush1.msra.mxu0 0.0
          %340 = vmatprep.subr.mxu0 0.0
          %341 = vmatpush1.msra.mxu0 0.0
          %342 = vmatprep.subr.mxu0 0.0
          %343 = vmatpush1.msra.mxu0 0.0
          %344 = vmatprep.subr.mxu0 0.0
          %345 = vmatpush1.msra.mxu0 0.0
          %346 = vmatprep.subr.mxu0 0.0
          %347 = vmatpush1.msra.mxu0 0.0
          %348 = vmatprep.subr.mxu0 0.0
          %349 = vmatpush1.msra.mxu0 0.0
          %350 = vmatprep.subr.mxu0 0.0
          %351 = vmatpush1.msra.mxu0 0.0
          %352 = vmatprep.subr.mxu0 0.0
          %353 = vmatpush1.msra.mxu0 0.0
          %354 = vmatprep.subr.mxu0 0.0
          %355 = vmatpush1.msra.mxu0 0.0
          %356 = vmatprep.subr.mxu0 0.0
          %357 = vmatpush1.msra.mxu0 0.0
          %358 = vmatprep.subr.mxu0 0.0
          %359 = vmatpush1.msra.mxu0 0.0
          %360 = vmatprep.subr.mxu0 0.0
          %361 = vmatpush1.msra.mxu0 0.0
          %362 = vmatprep.subr.mxu0 0.0
          %363 = vmatpush1.msra.mxu0 0.0
          %364 = vmatprep.mubr.f32.mxu0 0.0
          %v365 = vand.u32 %v296, 4294901760
          %v366 = vsub.f32 %v296, %v365
          %v367 = vand.u32 %v366, 4294901760
          %v368 = vsub.f32 %v366, %v367
          %v369 = vand.u32 %v368, 4294901760
          %370 = vmatmul.mubr.f32.gmra.mrb[0].mxu0 %v369
          %v371 = vpop.f32.mrb[0].mxu0
          %v372 = vadd.f32 %v232, %v371
          %v373 = vpop.f32.mrb[0].mxu0
          %v374 = vadd.f32 %v232, %v373
          %375 = vdwg.mxu0
          %v376 = vand.u32 %v292, 4294901760
          %v377 = vsub.f32 %v292, %v376
          %v378 = vand.u32 %v377, 4294901760
          %v379 = vsub.f32 %v377, %v378
          %v380 = vand.u32 %v379, 4294901760
          %381 = vmatprep.subr.mxu0 %v380
          %v382 = vand.u32 %v291, 4294901760
          %v383 = vsub.f32 %v291, %v382
          %v384 = vand.u32 %v383, 4294901760
          %v385 = vsub.f32 %v383, %v384
          %v386 = vand.u32 %v385, 4294901760
          %387 = vmatpush1.msra.mxu0 %v386
          %388 = vmatprep.subr.mxu0 0.0
          %389 = vmatpush1.msra.mxu0 0.0
          %390 = vmatprep.subr.mxu0 0.0
          %391 = vmatpush1.msra.mxu0 0.0
          %392 = vmatprep.subr.mxu0 0.0
          %393 = vmatpush1.msra.mxu0 0.0
          %394 = vmatprep.subr.mxu0 0.0
          %395 = vmatpush1.msra.mxu0 0.0
          %396 = vmatprep.subr.mxu0 0.0
          %397 = vmatpush1.msra.mxu0 0.0
          %398 = vmatprep.subr.mxu0 0.0
          %399 = vmatpush1.msra.mxu0 0.0
          %400 = vmatprep.subr.mxu0 0.0
          %401 = vmatpush1.msra.mxu0 0.0
          %402 = vmatprep.subr.mxu0 0.0
          %403 = vmatpush1.msra.mxu0 0.0
          %404 = vmatprep.subr.mxu0 0.0
          %405 = vmatpush1.msra.mxu0 0.0
          %406 = vmatprep.subr.mxu0 0.0
          %407 = vmatpush1.msra.mxu0 0.0
          %408 = vmatprep.subr.mxu0 0.0
          %409 = vmatpush1.msra.mxu0 0.0
          %410 = vmatprep.subr.mxu0 0.0
          %411 = vmatpush1.msra.mxu0 0.0
          %412 = vmatprep.subr.mxu0 0.0
          %413 = vmatpush1.msra.mxu0 0.0
          %414 = vmatprep.subr.mxu0 0.0
          %415 = vmatpush1.msra.mxu0 0.0
          %416 = vmatprep.subr.mxu0 0.0
          %417 = vmatpush1.msra.mxu0 0.0
          %418 = vmatprep.subr.mxu0 0.0
          %419 = vmatpush1.msra.mxu0 0.0
          %420 = vmatprep.subr.mxu0 0.0
          %421 = vmatpush1.msra.mxu0 0.0
          %422 = vmatprep.subr.mxu0 0.0
          %423 = vmatpush1.msra.mxu0 0.0
          %424 = vmatprep.subr.mxu0 0.0
          %425 = vmatpush1.msra.mxu0 0.0
          %426 = vmatprep.subr.mxu0 0.0
          %427 = vmatpush1.msra.mxu0 0.0
          %428 = vmatprep.subr.mxu0 0.0
          %429 = vmatpush1.msra.mxu0 0.0
          %430 = vmatprep.subr.mxu0 0.0
          %431 = vmatpush1.msra.mxu0 0.0
          %432 = vmatprep.subr.mxu0 0.0
          %433 = vmatpush1.msra.mxu0 0.0
          %434 = vmatprep.subr.mxu0 0.0
          %435 = vmatpush1.msra.mxu0 0.0
          %436 = vmatprep.subr.mxu0 0.0
          %437 = vmatpush1.msra.mxu0 0.0
          %438 = vmatprep.subr.mxu0 0.0
          %439 = vmatpush1.msra.mxu0 0.0
          %440 = vmatprep.subr.mxu0 0.0
          %441 = vmatpush1.msra.mxu0 0.0
          %442 = vmatprep.subr.mxu0 0.0
          %443 = vmatpush1.msra.mxu0 0.0
          %444 = vmatprep.subr.mxu0 0.0
          %445 = vmatpush1.msra.mxu0 0.0
          %446 = vmatprep.subr.mxu0 0.0
          %447 = vmatpush1.msra.mxu0 0.0
          %448 = vmatprep.subr.mxu0 0.0
          %449 = vmatpush1.msra.mxu0 0.0
          %450 = vmatprep.mubr.f32.mxu0 0.0
          %v451 = vand.u32 %v296, 4294901760
          %452 = vmatmul.mubr.f32.gmra.mrb[0].mxu0 %v451
          %v453 = vpop.f32.mrb[0].mxu0
          %v454 = vadd.f32 %v372, %v453
          %v455 = vpop.f32.mrb[0].mxu0
          %v456 = vadd.f32 %v374, %v455
          %457 = vdwg.mxu0
          %v458 = vand.u32 %v292, 4294901760
          %v459 = vsub.f32 %v292, %v458
          %460 = vmatprep.subr.mxu0 %v459
          %v461 = vand.u32 %v291, 4294901760
          %v462 = vsub.f32 %v291, %v461
          %463 = vmatpush1.msra.mxu0 %v462
          %464 = vmatprep.subr.mxu0 0.0
          %465 = vmatpush1.msra.mxu0 0.0
          %466 = vmatprep.subr.mxu0 0.0
          %467 = vmatpush1.msra.mxu0 0.0
          %468 = vmatprep.subr.mxu0 0.0
          %469 = vmatpush1.msra.mxu0 0.0
          %470 = vmatprep.subr.mxu0 0.0
          %471 = vmatpush1.msra.mxu0 0.0
          %472 = vmatprep.subr.mxu0 0.0
          %473 = vmatpush1.msra.mxu0 0.0
          %474 = vmatprep.subr.mxu0 0.0
          %475 = vmatpush1.msra.mxu0 0.0
          %476 = vmatprep.subr.mxu0 0.0
          %477 = vmatpush1.msra.mxu0 0.0
          %478 = vmatprep.subr.mxu0 0.0
          %479 = vmatpush1.msra.mxu0 0.0
          %480 = vmatprep.subr.mxu0 0.0
          %481 = vmatpush1.msra.mxu0 0.0
          %482 = vmatprep.subr.mxu0 0.0
          %483 = vmatpush1.msra.mxu0 0.0
          %484 = vmatprep.subr.mxu0 0.0
          %485 = vmatpush1.msra.mxu0 0.0
          %486 = vmatprep.subr.mxu0 0.0
          %487 = vmatpush1.msra.mxu0 0.0
          %488 = vmatprep.subr.mxu0 0.0
          %489 = vmatpush1.msra.mxu0 0.0
          %490 = vmatprep.subr.mxu0 0.0
          %491 = vmatpush1.msra.mxu0 0.0
          %492 = vmatprep.subr.mxu0 0.0
          %493 = vmatpush1.msra.mxu0 0.0
          %494 = vmatprep.subr.mxu0 0.0
          %495 = vmatpush1.msra.mxu0 0.0
          %496 = vmatprep.subr.mxu0 0.0
          %497 = vmatpush1.msra.mxu0 0.0
          %498 = vmatprep.subr.mxu0 0.0
          %499 = vmatpush1.msra.mxu0 0.0
          %500 = vmatprep.subr.mxu0 0.0
          %501 = vmatpush1.msra.mxu0 0.0
          %502 = vmatprep.subr.mxu0 0.0
          %503 = vmatpush1.msra.mxu0 0.0
          %504 = vmatprep.subr.mxu0 0.0
          %505 = vmatpush1.msra.mxu0 0.0
          %506 = vmatprep.subr.mxu0 0.0
          %507 = vmatpush1.msra.mxu0 0.0
          %508 = vmatprep.subr.mxu0 0.0
          %509 = vmatpush1.msra.mxu0 0.0
          %510 = vmatprep.subr.mxu0 0.0
          %511 = vmatpush1.msra.mxu0 0.0
          %512 = vmatprep.subr.mxu0 0.0
          %513 = vmatpush1.msra.mxu0 0.0
          %514 = vmatprep.subr.mxu0 0.0
          %515 = vmatpush1.msra.mxu0 0.0
          %516 = vmatprep.subr.mxu0 0.0
          %517 = vmatpush1.msra.mxu0 0.0
          %518 = vmatprep.subr.mxu0 0.0
          %519 = vmatpush1.msra.mxu0 0.0
          %520 = vmatprep.subr.mxu0 0.0
          %521 = vmatpush1.msra.mxu0 0.0
          %522 = vmatprep.subr.mxu0 0.0
          %523 = vmatpush1.msra.mxu0 0.0
          %524 = vmatprep.subr.mxu0 0.0
          %525 = vmatpush1.msra.mxu0 0.0
          %526 = vmatprep.mubr.f32.mxu0 0.0
          %v527 = vand.u32 %v296, 4294901760
          %v528 = vsub.f32 %v296, %v527
          %529 = vmatmul.mubr.f32.gmra.mrb[0].mxu0 %v528
          %v530 = vpop.f32.mrb[0].mxu0
          %v531 = vadd.f32 %v454, %v530
          %v532 = vpop.f32.mrb[0].mxu0
          %v533 = vadd.f32 %v456, %v532
          %534 = vdwg.mxu0
          %v535 = vand.u32 %v292, 4294901760
          %536 = vmatprep.subr.mxu0 %v535
          %v537 = vand.u32 %v291, 4294901760
          %538 = vmatpush1.msra.mxu0 %v537
          %539 = vmatprep.subr.mxu0 0.0
          %540 = vmatpush1.msra.mxu0 0.0
          %541 = vmatprep.subr.mxu0 0.0
          %542 = vmatpush1.msra.mxu0 0.0
          %543 = vmatprep.subr.mxu0 0.0
          %544 = vmatpush1.msra.mxu0 0.0
          %545 = vmatprep.subr.mxu0 0.0
          %546 = vmatpush1.msra.mxu0 0.0
          %547 = vmatprep.subr.mxu0 0.0
          %548 = vmatpush1.msra.mxu0 0.0
          %549 = vmatprep.subr.mxu0 0.0
          %550 = vmatpush1.msra.mxu0 0.0
          %551 = vmatprep.subr.mxu0 0.0
          %552 = vmatpush1.msra.mxu0 0.0
          %553 = vmatprep.subr.mxu0 0.0
          %554 = vmatpush1.msra.mxu0 0.0
          %555 = vmatprep.subr.mxu0 0.0
          %556 = vmatpush1.msra.mxu0 0.0
          %557 = vmatprep.subr.mxu0 0.0
          %558 = vmatpush1.msra.mxu0 0.0
          %559 = vmatprep.subr.mxu0 0.0
          %560 = vmatpush1.msra.mxu0 0.0
          %561 = vmatprep.subr.mxu0 0.0
          %562 = vmatpush1.msra.mxu0 0.0
          %563 = vmatprep.subr.mxu0 0.0
          %564 = vmatpush1.msra.mxu0 0.0
          %565 = vmatprep.subr.mxu0 0.0
          %566 = vmatpush1.msra.mxu0 0.0
          %567 = vmatprep.subr.mxu0 0.0
          %568 = vmatpush1.msra.mxu0 0.0
          %569 = vmatprep.subr.mxu0 0.0
          %570 = vmatpush1.msra.mxu0 0.0
          %571 = vmatprep.subr.mxu0 0.0
          %572 = vmatpush1.msra.mxu0 0.0
          %573 = vmatprep.subr.mxu0 0.0
          %574 = vmatpush1.msra.mxu0 0.0
          %575 = vmatprep.subr.mxu0 0.0
          %576 = vmatpush1.msra.mxu0 0.0
          %577 = vmatprep.subr.mxu0 0.0
          %578 = vmatpush1.msra.mxu0 0.0
          %579 = vmatprep.subr.mxu0 0.0
          %580 = vmatpush1.msra.mxu0 0.0
          %581 = vmatprep.subr.mxu0 0.0
          %582 = vmatpush1.msra.mxu0 0.0
          %583 = vmatprep.subr.mxu0 0.0
          %584 = vmatpush1.msra.mxu0 0.0
          %585 = vmatprep.subr.mxu0 0.0
          %586 = vmatpush1.msra.mxu0 0.0
          %587 = vmatprep.subr.mxu0 0.0
          %588 = vmatpush1.msra.mxu0 0.0
          %589 = vmatprep.subr.mxu0 0.0
          %590 = vmatpush1.msra.mxu0 0.0
          %591 = vmatprep.subr.mxu0 0.0
          %592 = vmatpush1.msra.mxu0 0.0
          %593 = vmatprep.subr.mxu0 0.0
          %594 = vmatpush1.msra.mxu0 0.0
          %595 = vmatprep.subr.mxu0 0.0
          %596 = vmatpush1.msra.mxu0 0.0
          %597 = vmatprep.subr.mxu0 0.0
          %598 = vmatpush1.msra.mxu0 0.0
          %599 = vmatprep.subr.mxu0 0.0
          %600 = vmatpush1.msra.mxu0 0.0
          %601 = vmatprep.mubr.f32.mxu0 0.0
          %v602 = vand.u32 %v296, 4294901760
          %v603 = vsub.f32 %v296, %v602
          %v604 = vand.u32 %v603, 4294901760
          %605 = vmatmul.mubr.f32.gmra.mrb[0].mxu0 %v604
          %v606 = vpop.f32.mrb[0].mxu0
          %v607 = vadd.f32 %v531, %v606
          %v608 = vpop.f32.mrb[0].mxu0
          %v609 = vadd.f32 %v533, %v608
          %610 = vdwg.mxu0
          %v611 = vand.u32 %v292, 4294901760
          %v612 = vsub.f32 %v292, %v611
          %v613 = vand.u32 %v612, 4294901760
          %614 = vmatprep.subr.mxu0 %v613
          %v615 = vand.u32 %v291, 4294901760
          %v616 = vsub.f32 %v291, %v615
          %v617 = vand.u32 %v616, 4294901760
          %618 = vmatpush1.msra.mxu0 %v617
          %619 = vmatprep.subr.mxu0 0.0
          %620 = vmatpush1.msra.mxu0 0.0
          %621 = vmatprep.subr.mxu0 0.0
          %622 = vmatpush1.msra.mxu0 0.0
          %623 = vmatprep.subr.mxu0 0.0
          %624 = vmatpush1.msra.mxu0 0.0
          %625 = vmatprep.subr.mxu0 0.0
          %626 = vmatpush1.msra.mxu0 0.0
          %627 = vmatprep.subr.mxu0 0.0
          %628 = vmatpush1.msra.mxu0 0.0
          %629 = vmatprep.subr.mxu0 0.0
          %630 = vmatpush1.msra.mxu0 0.0
          %631 = vmatprep.subr.mxu0 0.0
          %632 = vmatpush1.msra.mxu0 0.0
          %633 = vmatprep.subr.mxu0 0.0
          %634 = vmatpush1.msra.mxu0 0.0
          %635 = vmatprep.subr.mxu0 0.0
          %636 = vmatpush1.msra.mxu0 0.0
          %637 = vmatprep.subr.mxu0 0.0
          %638 = vmatpush1.msra.mxu0 0.0
          %639 = vmatprep.subr.mxu0 0.0
          %640 = vmatpush1.msra.mxu0 0.0
          %641 = vmatprep.subr.mxu0 0.0
          %642 = vmatpush1.msra.mxu0 0.0
          %643 = vmatprep.subr.mxu0 0.0
          %644 = vmatpush1.msra.mxu0 0.0
          %645 = vmatprep.subr.mxu0 0.0
          %646 = vmatpush1.msra.mxu0 0.0
          %647 = vmatprep.subr.mxu0 0.0
          %648 = vmatpush1.msra.mxu0 0.0
          %649 = vmatprep.subr.mxu0 0.0
          %650 = vmatpush1.msra.mxu0 0.0
          %651 = vmatprep.subr.mxu0 0.0
          %652 = vmatpush1.msra.mxu0 0.0
          %653 = vmatprep.subr.mxu0 0.0
          %654 = vmatpush1.msra.mxu0 0.0
          %655 = vmatprep.subr.mxu0 0.0
          %656 = vmatpush1.msra.mxu0 0.0
          %657 = vmatprep.subr.mxu0 0.0
          %658 = vmatpush1.msra.mxu0 0.0
          %659 = vmatprep.subr.mxu0 0.0
          %660 = vmatpush1.msra.mxu0 0.0
          %661 = vmatprep.subr.mxu0 0.0
          %662 = vmatpush1.msra.mxu0 0.0
          %663 = vmatprep.subr.mxu0 0.0
          %664 = vmatpush1.msra.mxu0 0.0
          %665 = vmatprep.subr.mxu0 0.0
          %666 = vmatpush1.msra.mxu0 0.0
          %667 = vmatprep.subr.mxu0 0.0
          %668 = vmatpush1.msra.mxu0 0.0
          %669 = vmatprep.subr.mxu0 0.0
          %670 = vmatpush1.msra.mxu0 0.0
          %671 = vmatprep.subr.mxu0 0.0
          %672 = vmatpush1.msra.mxu0 0.0
          %673 = vmatprep.subr.mxu0 0.0
          %674 = vmatpush1.msra.mxu0 0.0
          %675 = vmatprep.subr.mxu0 0.0
          %676 = vmatpush1.msra.mxu0 0.0
          %677 = vmatprep.subr.mxu0 0.0
          %678 = vmatpush1.msra.mxu0 0.0
          %679 = vmatprep.subr.mxu0 0.0
          %680 = vmatpush1.msra.mxu0 0.0
          %681 = vmatprep.mubr.f32.mxu0 0.0
          %v682 = vand.u32 %v296, 4294901760
          %683 = vmatmul.mubr.f32.gmra.mrb[0].mxu0 %v682
          %v684 = vpop.f32.mrb[0].mxu0
          %v685 = vadd.f32 %v607, %v684
          %v686 = vpop.f32.mrb[0].mxu0
          %v687 = vadd.f32 %v609, %v686
          %688 = vdwg.mxu0
          %v689 = vand.u32 %v292, 4294901760
          %690 = vmatprep.subr.mxu0 %v689
          %v691 = vand.u32 %v291, 4294901760
          %692 = vmatpush1.msra.mxu0 %v691
          %693 = vmatprep.subr.mxu0 0.0
          %694 = vmatpush1.msra.mxu0 0.0
          %695 = vmatprep.subr.mxu0 0.0
          %696 = vmatpush1.msra.mxu0 0.0
          %697 = vmatprep.subr.mxu0 0.0
          %698 = vmatpush1.msra.mxu0 0.0
          %699 = vmatprep.subr.mxu0 0.0
          %700 = vmatpush1.msra.mxu0 0.0
          %701 = vmatprep.subr.mxu0 0.0
          %702 = vmatpush1.msra.mxu0 0.0
          %703 = vmatprep.subr.mxu0 0.0
          %704 = vmatpush1.msra.mxu0 0.0
          %705 = vmatprep.subr.mxu0 0.0
          %706 = vmatpush1.msra.mxu0 0.0
          %707 = vmatprep.subr.mxu0 0.0
          %708 = vmatpush1.msra.mxu0 0.0
          %709 = vmatprep.subr.mxu0 0.0
          %710 = vmatpush1.msra.mxu0 0.0
          %711 = vmatprep.subr.mxu0 0.0
          %712 = vmatpush1.msra.mxu0 0.0
          %713 = vmatprep.subr.mxu0 0.0
          %714 = vmatpush1.msra.mxu0 0.0
          %715 = vmatprep.subr.mxu0 0.0
          %716 = vmatpush1.msra.mxu0 0.0
          %717 = vmatprep.subr.mxu0 0.0
          %718 = vmatpush1.msra.mxu0 0.0
          %719 = vmatprep.subr.mxu0 0.0
          %720 = vmatpush1.msra.mxu0 0.0
          %721 = vmatprep.subr.mxu0 0.0
          %722 = vmatpush1.msra.mxu0 0.0
          %723 = vmatprep.subr.mxu0 0.0
          %724 = vmatpush1.msra.mxu0 0.0
          %725 = vmatprep.subr.mxu0 0.0
          %726 = vmatpush1.msra.mxu0 0.0
          %727 = vmatprep.subr.mxu0 0.0
          %728 = vmatpush1.msra.mxu0 0.0
          %729 = vmatprep.subr.mxu0 0.0
          %730 = vmatpush1.msra.mxu0 0.0
          %731 = vmatprep.subr.mxu0 0.0
          %732 = vmatpush1.msra.mxu0 0.0
          %733 = vmatprep.subr.mxu0 0.0
          %734 = vmatpush1.msra.mxu0 0.0
          %735 = vmatprep.subr.mxu0 0.0
          %736 = vmatpush1.msra.mxu0 0.0
          %737 = vmatprep.subr.mxu0 0.0
          %738 = vmatpush1.msra.mxu0 0.0
          %739 = vmatprep.subr.mxu0 0.0
          %740 = vmatpush1.msra.mxu0 0.0
          %741 = vmatprep.subr.mxu0 0.0
          %742 = vmatpush1.msra.mxu0 0.0
          %743 = vmatprep.subr.mxu0 0.0
          %744 = vmatpush1.msra.mxu0 0.0
          %745 = vmatprep.subr.mxu0 0.0
          %746 = vmatpush1.msra.mxu0 0.0
          %747 = vmatprep.subr.mxu0 0.0
          %748 = vmatpush1.msra.mxu0 0.0
          %749 = vmatprep.subr.mxu0 0.0
          %750 = vmatpush1.msra.mxu0 0.0
          %751 = vmatprep.subr.mxu0 0.0
          %752 = vmatpush1.msra.mxu0 0.0
          %753 = vmatprep.subr.mxu0 0.0
          %754 = vmatpush1.msra.mxu0 0.0
          %755 = vmatprep.mubr.f32.mxu0 0.0
          %v756 = vand.u32 %v296, 4294901760
          %757 = vmatmul.mubr.f32.gmra.mrb[0].mxu0 %v756
          %v758 = vpop.f32.mrb[0].mxu0
          %v759 = vadd.f32 %v685, %v758
          %v760 = vpop.f32.mrb[0].mxu0
          %v761 = vadd.f32 %v687, %v760
          %762 = vdwg.mxu0
          %v763 = vmax.f32 %v759, 0.0
          %v764 = vmax.f32 %v761, 0.0
          %765 = vrot.lane.b32.xlu0 %v214, 118
          %v766 = vpop.permute.xlu0 %765
          %v767 = vsel %vm295, %v766, 0
          %v769 = vand.u32 %v764, 4294901760
          %770 = vmatprep.subr.mxu0 %v769
          %v771 = vand.u32 %v763, 4294901760
          %772 = vmatpush1.msra.mxu0 %v771
          %773 = vmatprep.subr.mxu0 0.0
          %774 = vmatpush1.msra.mxu0 0.0
          %775 = vmatprep.subr.mxu0 0.0
          %776 = vmatpush1.msra.mxu0 0.0
          %777 = vmatprep.subr.mxu0 0.0
          %778 = vmatpush1.msra.mxu0 0.0
          %779 = vmatprep.subr.mxu0 0.0
          %780 = vmatpush1.msra.mxu0 0.0
          %781 = vmatprep.subr.mxu0 0.0
          %782 = vmatpush1.msra.mxu0 0.0
          %783 = vmatprep.subr.mxu0 0.0
          %784 = vmatpush1.msra.mxu0 0.0
          %785 = vmatprep.subr.mxu0 0.0
          %786 = vmatpush1.msra.mxu0 0.0
          %787 = vmatprep.subr.mxu0 0.0
          %788 = vmatpush1.msra.mxu0 0.0
          %789 = vmatprep.subr.mxu0 0.0
          %790 = vmatpush1.msra.mxu0 0.0
          %791 = vmatprep.subr.mxu0 0.0
          %792 = vmatpush1.msra.mxu0 0.0
          %793 = vmatprep.subr.mxu0 0.0
          %794 = vmatpush1.msra.mxu0 0.0
          %795 = vmatprep.subr.mxu0 0.0
          %796 = vmatpush1.msra.mxu0 0.0
          %797 = vmatprep.subr.mxu0 0.0
          %798 = vmatpush1.msra.mxu0 0.0
          %799 = vmatprep.subr.mxu0 0.0
          %800 = vmatpush1.msra.mxu0 0.0
          %801 = vmatprep.subr.mxu0 0.0
          %802 = vmatpush1.msra.mxu0 0.0
          %803 = vmatprep.subr.mxu0 0.0
          %804 = vmatpush1.msra.mxu0 0.0
          %805 = vmatprep.subr.mxu0 0.0
          %806 = vmatpush1.msra.mxu0 0.0
          %807 = vmatprep.subr.mxu0 0.0
          %808 = vmatpush1.msra.mxu0 0.0
          %809 = vmatprep.subr.mxu0 0.0
          %810 = vmatpush1.msra.mxu0 0.0
          %811 = vmatprep.subr.mxu0 0.0
          %812 = vmatpush1.msra.mxu0 0.0
          %813 = vmatprep.subr.mxu0 0.0
          %814 = vmatpush1.msra.mxu0 0.0
          %815 = vmatprep.subr.mxu0 0.0
          %816 = vmatpush1.msra.mxu0 0.0
          %817 = vmatprep.subr.mxu0 0.0
          %818 = vmatpush1.msra.mxu0 0.0
          %819 = vmatprep.subr.mxu0 0.0
          %820 = vmatpush1.msra.mxu0 0.0
          %821 = vmatprep.subr.mxu0 0.0
          %822 = vmatpush1.msra.mxu0 0.0
          %823 = vmatprep.subr.mxu0 0.0
          %824 = vmatpush1.msra.mxu0 0.0
          %825 = vmatprep.subr.mxu0 0.0
          %826 = vmatpush1.msra.mxu0 0.0
          %827 = vmatprep.subr.mxu0 0.0
          %828 = vmatpush1.msra.mxu0 0.0
          %829 = vmatprep.subr.mxu0 0.0
          %830 = vmatpush1.msra.mxu0 0.0
          %831 = vmatprep.subr.mxu0 0.0
          %832 = vmatpush1.msra.mxu0 0.0
          %833 = vmatprep.subr.mxu0 0.0
          %834 = vmatpush1.msra.mxu0 0.0
          %835 = vmatprep.mubr.f32.mxu0 0.0
          %v836 = vand.u32 %v767, 4294901760
          %v837 = vsub.f32 %v767, %v836
          %v838 = vand.u32 %v837, 4294901760
          %v839 = vsub.f32 %v837, %v838
          %v840 = vand.u32 %v839, 4294901760
          %841 = vmatmul.mubr.f32.gmra.mrb[0].mxu0 %v840
          %v842 = vpop.f32.mrb[0].mxu0
          %v843 = vadd.f32 %v236, %v842
          %v844 = vpop.f32.mrb[0].mxu0
          %v845 = vadd.f32 %v236, %v844
          %846 = vdwg.mxu0
          %v847 = vand.u32 %v764, 4294901760
          %v848 = vsub.f32 %v764, %v847
          %v849 = vand.u32 %v848, 4294901760
          %v850 = vsub.f32 %v848, %v849
          %v851 = vand.u32 %v850, 4294901760
          %852 = vmatprep.subr.mxu0 %v851
          %v853 = vand.u32 %v763, 4294901760
          %v854 = vsub.f32 %v763, %v853
          %v855 = vand.u32 %v854, 4294901760
          %v856 = vsub.f32 %v854, %v855
          %v857 = vand.u32 %v856, 4294901760
          %858 = vmatpush1.msra.mxu0 %v857
          %859 = vmatprep.subr.mxu0 0.0
          %860 = vmatpush1.msra.mxu0 0.0
          %861 = vmatprep.subr.mxu0 0.0
          %862 = vmatpush1.msra.mxu0 0.0
          %863 = vmatprep.subr.mxu0 0.0
          %864 = vmatpush1.msra.mxu0 0.0
          %865 = vmatprep.subr.mxu0 0.0
          %866 = vmatpush1.msra.mxu0 0.0
          %867 = vmatprep.subr.mxu0 0.0
          %868 = vmatpush1.msra.mxu0 0.0
          %869 = vmatprep.subr.mxu0 0.0
          %870 = vmatpush1.msra.mxu0 0.0
          %871 = vmatprep.subr.mxu0 0.0
          %872 = vmatpush1.msra.mxu0 0.0
          %873 = vmatprep.subr.mxu0 0.0
          %874 = vmatpush1.msra.mxu0 0.0
          %875 = vmatprep.subr.mxu0 0.0
          %876 = vmatpush1.msra.mxu0 0.0
          %877 = vmatprep.subr.mxu0 0.0
          %878 = vmatpush1.msra.mxu0 0.0
          %879 = vmatprep.subr.mxu0 0.0
          %880 = vmatpush1.msra.mxu0 0.0
          %881 = vmatprep.subr.mxu0 0.0
          %882 = vmatpush1.msra.mxu0 0.0
          %883 = vmatprep.subr.mxu0 0.0
          %884 = vmatpush1.msra.mxu0 0.0
          %885 = vmatprep.subr.mxu0 0.0
          %886 = vmatpush1.msra.mxu0 0.0
          %887 = vmatprep.subr.mxu0 0.0
          %888 = vmatpush1.msra.mxu0 0.0
          %889 = vmatprep.subr.mxu0 0.0
          %890 = vmatpush1.msra.mxu0 0.0
          %891 = vmatprep.subr.mxu0 0.0
          %892 = vmatpush1.msra.mxu0 0.0
          %893 = vmatprep.subr.mxu0 0.0
          %894 = vmatpush1.msra.mxu0 0.0
          %895 = vmatprep.subr.mxu0 0.0
          %896 = vmatpush1.msra.mxu0 0.0
          %897 = vmatprep.subr.mxu0 0.0
          %898 = vmatpush1.msra.mxu0 0.0
          %899 = vmatprep.subr.mxu0 0.0
          %900 = vmatpush1.msra.mxu0 0.0
          %901 = vmatprep.subr.mxu0 0.0
          %902 = vmatpush1.msra.mxu0 0.0
          %903 = vmatprep.subr.mxu0 0.0
          %904 = vmatpush1.msra.mxu0 0.0
          %905 = vmatprep.subr.mxu0 0.0
          %906 = vmatpush1.msra.mxu0 0.0
          %907 = vmatprep.subr.mxu0 0.0
          %908 = vmatpush1.msra.mxu0 0.0
          %909 = vmatprep.subr.mxu0 0.0
          %910 = vmatpush1.msra.mxu0 0.0
          %911 = vmatprep.subr.mxu0 0.0
          %912 = vmatpush1.msra.mxu0 0.0
          %913 = vmatprep.subr.mxu0 0.0
          %914 = vmatpush1.msra.mxu0 0.0
          %915 = vmatprep.subr.mxu0 0.0
          %916 = vmatpush1.msra.mxu0 0.0
          %917 = vmatprep.subr.mxu0 0.0
          %918 = vmatpush1.msra.mxu0 0.0
          %919 = vmatprep.subr.mxu0 0.0
          %920 = vmatpush1.msra.mxu0 0.0
          %921 = vmatprep.mubr.f32.mxu0 0.0
          %v922 = vand.u32 %v767, 4294901760
          %923 = vmatmul.mubr.f32.gmra.mrb[0].mxu0 %v922
          %v924 = vpop.f32.mrb[0].mxu0
          %v925 = vadd.f32 %v843, %v924
          %v926 = vpop.f32.mrb[0].mxu0
          %v927 = vadd.f32 %v845, %v926
          %928 = vdwg.mxu0
          %v929 = vand.u32 %v764, 4294901760
          %v930 = vsub.f32 %v764, %v929
          %931 = vmatprep.subr.mxu0 %v930
          %v932 = vand.u32 %v763, 4294901760
          %v933 = vsub.f32 %v763, %v932
          %934 = vmatpush1.msra.mxu0 %v933
          %935 = vmatprep.subr.mxu0 0.0
          %936 = vmatpush1.msra.mxu0 0.0
          %937 = vmatprep.subr.mxu0 0.0
          %938 = vmatpush1.msra.mxu0 0.0
          %939 = vmatprep.subr.mxu0 0.0
          %940 = vmatpush1.msra.mxu0 0.0
          %941 = vmatprep.subr.mxu0 0.0
          %942 = vmatpush1.msra.mxu0 0.0
          %943 = vmatprep.subr.mxu0 0.0
          %944 = vmatpush1.msra.mxu0 0.0
          %945 = vmatprep.subr.mxu0 0.0
          %946 = vmatpush1.msra.mxu0 0.0
          %947 = vmatprep.subr.mxu0 0.0
          %948 = vmatpush1.msra.mxu0 0.0
          %949 = vmatprep.subr.mxu0 0.0
          %950 = vmatpush1.msra.mxu0 0.0
          %951 = vmatprep.subr.mxu0 0.0
          %952 = vmatpush1.msra.mxu0 0.0
          %953 = vmatprep.subr.mxu0 0.0
          %954 = vmatpush1.msra.mxu0 0.0
          %955 = vmatprep.subr.mxu0 0.0
          %956 = vmatpush1.msra.mxu0 0.0
          %957 = vmatprep.subr.mxu0 0.0
          %958 = vmatpush1.msra.mxu0 0.0
          %959 = vmatprep.subr.mxu0 0.0
          %960 = vmatpush1.msra.mxu0 0.0
          %961 = vmatprep.subr.mxu0 0.0
          %962 = vmatpush1.msra.mxu0 0.0
          %963 = vmatprep.subr.mxu0 0.0
          %964 = vmatpush1.msra.mxu0 0.0
          %965 = vmatprep.subr.mxu0 0.0
          %966 = vmatpush1.msra.mxu0 0.0
          %967 = vmatprep.subr.mxu0 0.0
          %968 = vmatpush1.msra.mxu0 0.0
          %969 = vmatprep.subr.mxu0 0.0
          %970 = vmatpush1.msra.mxu0 0.0
          %971 = vmatprep.subr.mxu0 0.0
          %972 = vmatpush1.msra.mxu0 0.0
          %973 = vmatprep.subr.mxu0 0.0
          %974 = vmatpush1.msra.mxu0 0.0
          %975 = vmatprep.subr.mxu0 0.0
          %976 = vmatpush1.msra.mxu0 0.0
          %977 = vmatprep.subr.mxu0 0.0
          %978 = vmatpush1.msra.mxu0 0.0
          %979 = vmatprep.subr.mxu0 0.0
          %980 = vmatpush1.msra.mxu0 0.0
          %981 = vmatprep.subr.mxu0 0.0
          %982 = vmatpush1.msra.mxu0 0.0
          %983 = vmatprep.subr.mxu0 0.0
          %984 = vmatpush1.msra.mxu0 0.0
          %985 = vmatprep.subr.mxu0 0.0
          %986 = vmatpush1.msra.mxu0 0.0
          %987 = vmatprep.subr.mxu0 0.0
          %988 = vmatpush1.msra.mxu0 0.0
          %989 = vmatprep.subr.mxu0 0.0
          %990 = vmatpush1.msra.mxu0 0.0
          %991 = vmatprep.subr.mxu0 0.0
          %992 = vmatpush1.msra.mxu0 0.0
          %993 = vmatprep.subr.mxu0 0.0
          %994 = vmatpush1.msra.mxu0 0.0
          %995 = vmatprep.subr.mxu0 0.0
          %996 = vmatpush1.msra.mxu0 0.0
          %997 = vmatprep.mubr.f32.mxu0 0.0
          %v998 = vand.u32 %v767, 4294901760
          %v999 = vsub.f32 %v767, %v998
          %1000 = vmatmul.mubr.f32.gmra.mrb[0].mxu0 %v999
          %v1001 = vpop.f32.mrb[0].mxu0
          %v1002 = vadd.f32 %v925, %v1001
          %v1003 = vpop.f32.mrb[0].mxu0
          %v1004 = vadd.f32 %v927, %v1003
          %1005 = vdwg.mxu0
          %v1006 = vand.u32 %v764, 4294901760
          %1007 = vmatprep.subr.mxu0 %v1006
          %v1008 = vand.u32 %v763, 4294901760
          %1009 = vmatpush1.msra.mxu0 %v1008
          %1010 = vmatprep.subr.mxu0 0.0
          %1011 = vmatpush1.msra.mxu0 0.0
          %1012 = vmatprep.subr.mxu0 0.0
          %1013 = vmatpush1.msra.mxu0 0.0
          %1014 = vmatprep.subr.mxu0 0.0
          %1015 = vmatpush1.msra.mxu0 0.0
          %1016 = vmatprep.subr.mxu0 0.0
          %1017 = vmatpush1.msra.mxu0 0.0
          %1018 = vmatprep.subr.mxu0 0.0
          %1019 = vmatpush1.msra.mxu0 0.0
          %1020 = vmatprep.subr.mxu0 0.0
          %1021 = vmatpush1.msra.mxu0 0.0
          %1022 = vmatprep.subr.mxu0 0.0
          %1023 = vmatpush1.msra.mxu0 0.0
          %1024 = vmatprep.subr.mxu0 0.0
          %1025 = vmatpush1.msra.mxu0 0.0
          %1026 = vmatprep.subr.mxu0 0.0
          %1027 = vmatpush1.msra.mxu0 0.0
          %1028 = vmatprep.subr.mxu0 0.0
          %1029 = vmatpush1.msra.mxu0 0.0
          %1030 = vmatprep.subr.mxu0 0.0
          %1031 = vmatpush1.msra.mxu0 0.0
          %1032 = vmatprep.subr.mxu0 0.0
          %1033 = vmatpush1.msra.mxu0 0.0
          %1034 = vmatprep.subr.mxu0 0.0
          %1035 = vmatpush1.msra.mxu0 0.0
          %1036 = vmatprep.subr.mxu0 0.0
          %1037 = vmatpush1.msra.mxu0 0.0
          %1038 = vmatprep.subr.mxu0 0.0
          %1039 = vmatpush1.msra.mxu0 0.0
          %1040 = vmatprep.subr.mxu0 0.0
          %1041 = vmatpush1.msra.mxu0 0.0
          %1042 = vmatprep.subr.mxu0 0.0
          %1043 = vmatpush1.msra.mxu0 0.0
          %1044 = vmatprep.subr.mxu0 0.0
          %1045 = vmatpush1.msra.mxu0 0.0
          %1046 = vmatprep.subr.mxu0 0.0
          %1047 = vmatpush1.msra.mxu0 0.0
          %1048 = vmatprep.subr.mxu0 0.0
          %1049 = vmatpush1.msra.mxu0 0.0
          %1050 = vmatprep.subr.mxu0 0.0
          %1051 = vmatpush1.msra.mxu0 0.0
          %1052 = vmatprep.subr.mxu0 0.0
          %1053 = vmatpush1.msra.mxu0 0.0
          %1054 = vmatprep.subr.mxu0 0.0
          %1055 = vmatpush1.msra.mxu0 0.0
          %1056 = vmatprep.subr.mxu0 0.0
          %1057 = vmatpush1.msra.mxu0 0.0
          %1058 = vmatprep.subr.mxu0 0.0
          %1059 = vmatpush1.msra.mxu0 0.0
          %1060 = vmatprep.subr.mxu0 0.0
          %1061 = vmatpush1.msra.mxu0 0.0
          %1062 = vmatprep.subr.mxu0 0.0
          %1063 = vmatpush1.msra.mxu0 0.0
          %1064 = vmatprep.subr.mxu0 0.0
          %1065 = vmatpush1.msra.mxu0 0.0
          %1066 = vmatprep.subr.mxu0 0.0
          %1067 = vmatpush1.msra.mxu0 0.0
          %1068 = vmatprep.subr.mxu0 0.0
          %1069 = vmatpush1.msra.mxu0 0.0
          %1070 = vmatprep.subr.mxu0 0.0
          %1071 = vmatpush1.msra.mxu0 0.0
          %1072 = vmatprep.mubr.f32.mxu0 0.0
          %v1073 = vand.u32 %v767, 4294901760
          %v1074 = vsub.f32 %v767, %v1073
          %v1075 = vand.u32 %v1074, 4294901760
          %1076 = vmatmul.mubr.f32.gmra.mrb[0].mxu0 %v1075
          %v1077 = vpop.f32.mrb[0].mxu0
          %v1078 = vadd.f32 %v1002, %v1077
          %v1079 = vpop.f32.mrb[0].mxu0
          %v1080 = vadd.f32 %v1004, %v1079
          %1081 = vdwg.mxu0
          %v1082 = vand.u32 %v764, 4294901760
          %v1083 = vsub.f32 %v764, %v1082
          %v1084 = vand.u32 %v1083, 4294901760
          %1085 = vmatprep.subr.mxu0 %v1084
          %v1086 = vand.u32 %v763, 4294901760
          %v1087 = vsub.f32 %v763, %v1086
          %v1088 = vand.u32 %v1087, 4294901760
          %1089 = vmatpush1.msra.mxu0 %v1088
          %1090 = vmatprep.subr.mxu0 0.0
          %1091 = vmatpush1.msra.mxu0 0.0
          %1092 = vmatprep.subr.mxu0 0.0
          %1093 = vmatpush1.msra.mxu0 0.0
          %1094 = vmatprep.subr.mxu0 0.0
          %1095 = vmatpush1.msra.mxu0 0.0
          %1096 = vmatprep.subr.mxu0 0.0
          %1097 = vmatpush1.msra.mxu0 0.0
          %1098 = vmatprep.subr.mxu0 0.0
          %1099 = vmatpush1.msra.mxu0 0.0
          %1100 = vmatprep.subr.mxu0 0.0
          %1101 = vmatpush1.msra.mxu0 0.0
          %1102 = vmatprep.subr.mxu0 0.0
          %1103 = vmatpush1.msra.mxu0 0.0
          %1104 = vmatprep.subr.mxu0 0.0
          %1105 = vmatpush1.msra.mxu0 0.0
          %1106 = vmatprep.subr.mxu0 0.0
          %1107 = vmatpush1.msra.mxu0 0.0
          %1108 = vmatprep.subr.mxu0 0.0
          %1109 = vmatpush1.msra.mxu0 0.0
          %1110 = vmatprep.subr.mxu0 0.0
          %1111 = vmatpush1.msra.mxu0 0.0
          %1112 = vmatprep.subr.mxu0 0.0
          %1113 = vmatpush1.msra.mxu0 0.0
          %1114 = vmatprep.subr.mxu0 0.0
          %1115 = vmatpush1.msra.mxu0 0.0
          %1116 = vmatprep.subr.mxu0 0.0
          %1117 = vmatpush1.msra.mxu0 0.0
          %1118 = vmatprep.subr.mxu0 0.0
          %1119 = vmatpush1.msra.mxu0 0.0
          %1120 = vmatprep.subr.mxu0 0.0
          %1121 = vmatpush1.msra.mxu0 0.0
          %1122 = vmatprep.subr.mxu0 0.0
          %1123 = vmatpush1.msra.mxu0 0.0
          %1124 = vmatprep.subr.mxu0 0.0
          %1125 = vmatpush1.msra.mxu0 0.0
          %1126 = vmatprep.subr.mxu0 0.0
          %1127 = vmatpush1.msra.mxu0 0.0
          %1128 = vmatprep.subr.mxu0 0.0
          %1129 = vmatpush1.msra.mxu0 0.0
          %1130 = vmatprep.subr.mxu0 0.0
          %1131 = vmatpush1.msra.mxu0 0.0
          %1132 = vmatprep.subr.mxu0 0.0
          %1133 = vmatpush1.msra.mxu0 0.0
          %1134 = vmatprep.subr.mxu0 0.0
          %1135 = vmatpush1.msra.mxu0 0.0
          %1136 = vmatprep.subr.mxu0 0.0
          %1137 = vmatpush1.msra.mxu0 0.0
          %1138 = vmatprep.subr.mxu0 0.0
          %1139 = vmatpush1.msra.mxu0 0.0
          %1140 = vmatprep.subr.mxu0 0.0
          %1141 = vmatpush1.msra.mxu0 0.0
          %1142 = vmatprep.subr.mxu0 0.0
          %1143 = vmatpush1.msra.mxu0 0.0
          %1144 = vmatprep.subr.mxu0 0.0
          %1145 = vmatpush1.msra.mxu0 0.0
          %1146 = vmatprep.subr.mxu0 0.0
          %1147 = vmatpush1.msra.mxu0 0.0
          %1148 = vmatprep.subr.mxu0 0.0
          %1149 = vmatpush1.msra.mxu0 0.0
          %1150 = vmatprep.subr.mxu0 0.0
          %1151 = vmatpush1.msra.mxu0 0.0
          %1152 = vmatprep.mubr.f32.mxu0 0.0
          %v1153 = vand.u32 %v767, 4294901760
          %1154 = vmatmul.mubr.f32.gmra.mrb[0].mxu0 %v1153
          %v1155 = vpop.f32.mrb[0].mxu0
          %v1156 = vadd.f32 %v1078, %v1155
          %v1157 = vpop.f32.mrb[0].mxu0
          %v1158 = vadd.f32 %v1080, %v1157
          %1159 = vdwg.mxu0
          %v1160 = vand.u32 %v764, 4294901760
          %1161 = vmatprep.subr.mxu0 %v1160
          %v1162 = vand.u32 %v763, 4294901760
          %1163 = vmatpush1.msra.mxu0 %v1162
          %1164 = vmatprep.subr.mxu0 0.0
          %1165 = vmatpush1.msra.mxu0 0.0
          %1166 = vmatprep.subr.mxu0 0.0
          %1167 = vmatpush1.msra.mxu0 0.0
          %1168 = vmatprep.subr.mxu0 0.0
          %1169 = vmatpush1.msra.mxu0 0.0
          %1170 = vmatprep.subr.mxu0 0.0
          %1171 = vmatpush1.msra.mxu0 0.0
          %1172 = vmatprep.subr.mxu0 0.0
          %1173 = vmatpush1.msra.mxu0 0.0
          %1174 = vmatprep.subr.mxu0 0.0
          %1175 = vmatpush1.msra.mxu0 0.0
          %1176 = vmatprep.subr.mxu0 0.0
          %1177 = vmatpush1.msra.mxu0 0.0
          %1178 = vmatprep.subr.mxu0 0.0
          %1179 = vmatpush1.msra.mxu0 0.0
          %1180 = vmatprep.subr.mxu0 0.0
          %1181 = vmatpush1.msra.mxu0 0.0
          %1182 = vmatprep.subr.mxu0 0.0
          %1183 = vmatpush1.msra.mxu0 0.0
          %1184 = vmatprep.subr.mxu0 0.0
          %1185 = vmatpush1.msra.mxu0 0.0
          %1186 = vmatprep.subr.mxu0 0.0
          %1187 = vmatpush1.msra.mxu0 0.0
          %1188 = vmatprep.subr.mxu0 0.0
          %1189 = vmatpush1.msra.mxu0 0.0
          %1190 = vmatprep.subr.mxu0 0.0
          %1191 = vmatpush1.msra.mxu0 0.0
          %1192 = vmatprep.subr.mxu0 0.0
          %1193 = vmatpush1.msra.mxu0 0.0
          %1194 = vmatprep.subr.mxu0 0.0
          %1195 = vmatpush1.msra.mxu0 0.0
          %1196 = vmatprep.subr.mxu0 0.0
          %1197 = vmatpush1.msra.mxu0 0.0
          %1198 = vmatprep.subr.mxu0 0.0
          %1199 = vmatpush1.msra.mxu0 0.0
          %1200 = vmatprep.subr.mxu0 0.0
          %1201 = vmatpush1.msra.mxu0 0.0
          %1202 = vmatprep.subr.mxu0 0.0
          %1203 = vmatpush1.msra.mxu0 0.0
          %1204 = vmatprep.subr.mxu0 0.0
          %1205 = vmatpush1.msra.mxu0 0.0
          %1206 = vmatprep.subr.mxu0 0.0
          %1207 = vmatpush1.msra.mxu0 0.0
          %1208 = vmatprep.subr.mxu0 0.0
          %1209 = vmatpush1.msra.mxu0 0.0
          %1210 = vmatprep.subr.mxu0 0.0
          %1211 = vmatpush1.msra.mxu0 0.0
          %1212 = vmatprep.subr.mxu0 0.0
          %1213 = vmatpush1.msra.mxu0 0.0
          %1214 = vmatprep.subr.mxu0 0.0
          %1215 = vmatpush1.msra.mxu0 0.0
          %1216 = vmatprep.subr.mxu0 0.0
          %1217 = vmatpush1.msra.mxu0 0.0
          %1218 = vmatprep.subr.mxu0 0.0
          %1219 = vmatpush1.msra.mxu0 0.0
          %1220 = vmatprep.subr.mxu0 0.0
          %1221 = vmatpush1.msra.mxu0 0.0
          %1222 = vmatprep.subr.mxu0 0.0
          %1223 = vmatpush1.msra.mxu0 0.0
          %1224 = vmatprep.subr.mxu0 0.0
          %1225 = vmatpush1.msra.mxu0 0.0
          %1226 = vmatprep.mubr.f32.mxu0 0.0
          %v1227 = vand.u32 %v767, 4294901760
          %1228 = vmatmul.mubr.f32.gmra.mrb[0].mxu0 %v1227
          %v1229 = vpop.f32.mrb[0].mxu0
          %v1230 = vadd.f32 %v1156, %v1229
          %v1231 = vpop.f32.mrb[0].mxu0
          %v1232 = vadd.f32 %v1158, %v1231
          %1233 = vdwg.mxu0
          %v1234 = vmax.f32 %v1230, 0.0
          %v1235 = vmax.f32 %v1232, 0.0
          %1236 = vrot.lane.b32.xlu0 %v214, 110
          %v1237 = vpop.permute.xlu0 %1236
          %v1238 = vsel %vm295, %v1237, 0
          %v1240 = vand.u32 %v1235, 4294901760
          %1241 = vmatprep.subr.mxu0 %v1240
          %v1242 = vand.u32 %v1234, 4294901760
          %1243 = vmatpush1.msra.mxu0 %v1242
          %1244 = vmatprep.subr.mxu0 0.0
          %1245 = vmatpush1.msra.mxu0 0.0
          %1246 = vmatprep.subr.mxu0 0.0
          %1247 = vmatpush1.msra.mxu0 0.0
          %1248 = vmatprep.subr.mxu0 0.0
          %1249 = vmatpush1.msra.mxu0 0.0
          %1250 = vmatprep.subr.mxu0 0.0
          %1251 = vmatpush1.msra.mxu0 0.0
          %1252 = vmatprep.subr.mxu0 0.0
          %1253 = vmatpush1.msra.mxu0 0.0
          %1254 = vmatprep.subr.mxu0 0.0
          %1255 = vmatpush1.msra.mxu0 0.0
          %1256 = vmatprep.subr.mxu0 0.0
          %1257 = vmatpush1.msra.mxu0 0.0
          %1258 = vmatprep.subr.mxu0 0.0
          %1259 = vmatpush1.msra.mxu0 0.0
          %1260 = vmatprep.subr.mxu0 0.0
          %1261 = vmatpush1.msra.mxu0 0.0
          %1262 = vmatprep.subr.mxu0 0.0
          %1263 = vmatpush1.msra.mxu0 0.0
          %1264 = vmatprep.subr.mxu0 0.0
          %1265 = vmatpush1.msra.mxu0 0.0
          %1266 = vmatprep.subr.mxu0 0.0
          %1267 = vmatpush1.msra.mxu0 0.0
          %1268 = vmatprep.subr.mxu0 0.0
          %1269 = vmatpush1.msra.mxu0 0.0
          %1270 = vmatprep.subr.mxu0 0.0
          %1271 = vmatpush1.msra.mxu0 0.0
          %1272 = vmatprep.subr.mxu0 0.0
          %1273 = vmatpush1.msra.mxu0 0.0
          %1274 = vmatprep.subr.mxu0 0.0
          %1275 = vmatpush1.msra.mxu0 0.0
          %1276 = vmatprep.subr.mxu0 0.0
          %1277 = vmatpush1.msra.mxu0 0.0
          %1278 = vmatprep.subr.mxu0 0.0
          %1279 = vmatpush1.msra.mxu0 0.0
          %1280 = vmatprep.subr.mxu0 0.0
          %1281 = vmatpush1.msra.mxu0 0.0
          %1282 = vmatprep.subr.mxu0 0.0
          %1283 = vmatpush1.msra.mxu0 0.0
          %1284 = vmatprep.subr.mxu0 0.0
          %1285 = vmatpush1.msra.mxu0 0.0
          %1286 = vmatprep.subr.mxu0 0.0
          %1287 = vmatpush1.msra.mxu0 0.0
          %1288 = vmatprep.subr.mxu0 0.0
          %1289 = vmatpush1.msra.mxu0 0.0
          %1290 = vmatprep.subr.mxu0 0.0
          %1291 = vmatpush1.msra.mxu0 0.0
          %1292 = vmatprep.subr.mxu0 0.0
          %1293 = vmatpush1.msra.mxu0 0.0
          %1294 = vmatprep.subr.mxu0 0.0
          %1295 = vmatpush1.msra.mxu0 0.0
          %1296 = vmatprep.subr.mxu0 0.0
          %1297 = vmatpush1.msra.mxu0 0.0
          %1298 = vmatprep.subr.mxu0 0.0
          %1299 = vmatpush1.msra.mxu0 0.0
          %1300 = vmatprep.subr.mxu0 0.0
          %1301 = vmatpush1.msra.mxu0 0.0
          %1302 = vmatprep.subr.mxu0 0.0
          %1303 = vmatpush1.msra.mxu0 0.0
          %1304 = vmatprep.subr.mxu0 0.0
          %1305 = vmatpush1.msra.mxu0 0.0
          %1306 = vmatprep.mubr.f32.mxu0 0.0
          %v1307 = vand.u32 %v1238, 4294901760
          %v1308 = vsub.f32 %v1238, %v1307
          %v1309 = vand.u32 %v1308, 4294901760
          %v1310 = vsub.f32 %v1308, %v1309
          %v1311 = vand.u32 %v1310, 4294901760
          %1312 = vmatmul.mubr.f32.gmra.mrb[0].mxu0 %v1311
          %v1313 = vpop.f32.mrb[0].mxu0
          %v1314 = vadd.f32 %v240, %v1313
          %v1315 = vpop.f32.mrb[0].mxu0
          %v1316 = vadd.f32 %v240, %v1315
          %1317 = vdwg.mxu0
          %v1318 = vand.u32 %v1235, 4294901760
          %v1319 = vsub.f32 %v1235, %v1318
          %v1320 = vand.u32 %v1319, 4294901760
          %v1321 = vsub.f32 %v1319, %v1320
          %v1322 = vand.u32 %v1321, 4294901760
          %1323 = vmatprep.subr.mxu0 %v1322
          %v1324 = vand.u32 %v1234, 4294901760
          %v1325 = vsub.f32 %v1234, %v1324
          %v1326 = vand.u32 %v1325, 4294901760
          %v1327 = vsub.f32 %v1325, %v1326
          %v1328 = vand.u32 %v1327, 4294901760
          %1329 = vmatpush1.msra.mxu0 %v1328
          %1330 = vmatprep.subr.mxu0 0.0
          %1331 = vmatpush1.msra.mxu0 0.0
          %1332 = vmatprep.subr.mxu0 0.0
          %1333 = vmatpush1.msra.mxu0 0.0
          %1334 = vmatprep.subr.mxu0 0.0
          %1335 = vmatpush1.msra.mxu0 0.0
          %1336 = vmatprep.subr.mxu0 0.0
          %1337 = vmatpush1.msra.mxu0 0.0
          %1338 = vmatprep.subr.mxu0 0.0
          %1339 = vmatpush1.msra.mxu0 0.0
          %1340 = vmatprep.subr.mxu0 0.0
          %1341 = vmatpush1.msra.mxu0 0.0
          %1342 = vmatprep.subr.mxu0 0.0
          %1343 = vmatpush1.msra.mxu0 0.0
          %1344 = vmatprep.subr.mxu0 0.0
          %1345 = vmatpush1.msra.mxu0 0.0
          %1346 = vmatprep.subr.mxu0 0.0
          %1347 = vmatpush1.msra.mxu0 0.0
          %1348 = vmatprep.subr.mxu0 0.0
          %1349 = vmatpush1.msra.mxu0 0.0
          %1350 = vmatprep.subr.mxu0 0.0
          %1351 = vmatpush1.msra.mxu0 0.0
          %1352 = vmatprep.subr.mxu0 0.0
          %1353 = vmatpush1.msra.mxu0 0.0
          %1354 = vmatprep.subr.mxu0 0.0
          %1355 = vmatpush1.msra.mxu0 0.0
          %1356 = vmatprep.subr.mxu0 0.0
          %1357 = vmatpush1.msra.mxu0 0.0
          %1358 = vmatprep.subr.mxu0 0.0
          %1359 = vmatpush1.msra.mxu0 0.0
          %1360 = vmatprep.subr.mxu0 0.0
          %1361 = vmatpush1.msra.mxu0 0.0
          %1362 = vmatprep.subr.mxu0 0.0
          %1363 = vmatpush1.msra.mxu0 0.0
          %1364 = vmatprep.subr.mxu0 0.0
          %1365 = vmatpush1.msra.mxu0 0.0
          %1366 = vmatprep.subr.mxu0 0.0
          %1367 = vmatpush1.msra.mxu0 0.0
          %1368 = vmatprep.subr.mxu0 0.0
          %1369 = vmatpush1.msra.mxu0 0.0
          %1370 = vmatprep.subr.mxu0 0.0
          %1371 = vmatpush1.msra.mxu0 0.0
          %1372 = vmatprep.subr.mxu0 0.0
          %1373 = vmatpush1.msra.mxu0 0.0
          %1374 = vmatprep.subr.mxu0 0.0
          %1375 = vmatpush1.msra.mxu0 0.0
          %1376 = vmatprep.subr.mxu0 0.0
          %1377 = vmatpush1.msra.mxu0 0.0
          %1378 = vmatprep.subr.mxu0 0.0
          %1379 = vmatpush1.msra.mxu0 0.0
          %1380 = vmatprep.subr.mxu0 0.0
          %1381 = vmatpush1.msra.mxu0 0.0
          %1382 = vmatprep.subr.mxu0 0.0
          %1383 = vmatpush1.msra.mxu0 0.0
          %1384 = vmatprep.subr.mxu0 0.0
          %1385 = vmatpush1.msra.mxu0 0.0
          %1386 = vmatprep.subr.mxu0 0.0
          %1387 = vmatpush1.msra.mxu0 0.0
          %1388 = vmatprep.subr.mxu0 0.0
          %1389 = vmatpush1.msra.mxu0 0.0
          %1390 = vmatprep.subr.mxu0 0.0
          %1391 = vmatpush1.msra.mxu0 0.0
          %1392 = vmatprep.mubr.f32.mxu0 0.0
          %v1393 = vand.u32 %v1238, 4294901760
          %1394 = vmatmul.mubr.f32.gmra.mrb[0].mxu0 %v1393
          %v1395 = vpop.f32.mrb[0].mxu0
          %v1396 = vadd.f32 %v1314, %v1395
          %v1397 = vpop.f32.mrb[0].mxu0
          %v1398 = vadd.f32 %v1316, %v1397
          %1399 = vdwg.mxu0
          %v1400 = vand.u32 %v1235, 4294901760
          %v1401 = vsub.f32 %v1235, %v1400
          %1402 = vmatprep.subr.mxu0 %v1401
          %v1403 = vand.u32 %v1234, 4294901760
          %v1404 = vsub.f32 %v1234, %v1403
          %1405 = vmatpush1.msra.mxu0 %v1404
          %1406 = vmatprep.subr.mxu0 0.0
          %1407 = vmatpush1.msra.mxu0 0.0
          %1408 = vmatprep.subr.mxu0 0.0
          %1409 = vmatpush1.msra.mxu0 0.0
          %1410 = vmatprep.subr.mxu0 0.0
          %1411 = vmatpush1.msra.mxu0 0.0
          %1412 = vmatprep.subr.mxu0 0.0
          %1413 = vmatpush1.msra.mxu0 0.0
          %1414 = vmatprep.subr.mxu0 0.0
          %1415 = vmatpush1.msra.mxu0 0.0
          %1416 = vmatprep.subr.mxu0 0.0
          %1417 = vmatpush1.msra.mxu0 0.0
          %1418 = vmatprep.subr.mxu0 0.0
          %1419 = vmatpush1.msra.mxu0 0.0
          %1420 = vmatprep.subr.mxu0 0.0
          %1421 = vmatpush1.msra.mxu0 0.0
          %1422 = vmatprep.subr.mxu0 0.0
          %1423 = vmatpush1.msra.mxu0 0.0
          %1424 = vmatprep.subr.mxu0 0.0
          %1425 = vmatpush1.msra.mxu0 0.0
          %1426 = vmatprep.subr.mxu0 0.0
          %1427 = vmatpush1.msra.mxu0 0.0
          %1428 = vmatprep.subr.mxu0 0.0
          %1429 = vmatpush1.msra.mxu0 0.0
          %1430 = vmatprep.subr.mxu0 0.0
          %1431 = vmatpush1.msra.mxu0 0.0
          %1432 = vmatprep.subr.mxu0 0.0
          %1433 = vmatpush1.msra.mxu0 0.0
          %1434 = vmatprep.subr.mxu0 0.0
          %1435 = vmatpush1.msra.mxu0 0.0
          %1436 = vmatprep.subr.mxu0 0.0
          %1437 = vmatpush1.msra.mxu0 0.0
          %1438 = vmatprep.subr.mxu0 0.0
          %1439 = vmatpush1.msra.mxu0 0.0
          %1440 = vmatprep.subr.mxu0 0.0
          %1441 = vmatpush1.msra.mxu0 0.0
          %1442 = vmatprep.subr.mxu0 0.0
          %1443 = vmatpush1.msra.mxu0 0.0
          %1444 = vmatprep.subr.mxu0 0.0
          %1445 = vmatpush1.msra.mxu0 0.0
          %1446 = vmatprep.subr.mxu0 0.0
          %1447 = vmatpush1.msra.mxu0 0.0
          %1448 = vmatprep.subr.mxu0 0.0
          %1449 = vmatpush1.msra.mxu0 0.0
          %1450 = vmatprep.subr.mxu0 0.0
          %1451 = vmatpush1.msra.mxu0 0.0
          %1452 = vmatprep.subr.mxu0 0.0
          %1453 = vmatpush1.msra.mxu0 0.0
          %1454 = vmatprep.subr.mxu0 0.0
          %1455 = vmatpush1.msra.mxu0 0.0
          %1456 = vmatprep.subr.mxu0 0.0
          %1457 = vmatpush1.msra.mxu0 0.0
          %1458 = vmatprep.subr.mxu0 0.0
          %1459 = vmatpush1.msra.mxu0 0.0
          %1460 = vmatprep.subr.mxu0 0.0
          %1461 = vmatpush1.msra.mxu0 0.0
          %1462 = vmatprep.subr.mxu0 0.0
          %1463 = vmatpush1.msra.mxu0 0.0
          %1464 = vmatprep.subr.mxu0 0.0
          %1465 = vmatpush1.msra.mxu0 0.0
          %1466 = vmatprep.subr.mxu0 0.0
          %1467 = vmatpush1.msra.mxu0 0.0
          %1468 = vmatprep.mubr.f32.mxu0 0.0
          %v1469 = vand.u32 %v1238, 4294901760
          %v1470 = vsub.f32 %v1238, %v1469
          %1471 = vmatmul.mubr.f32.gmra.mrb[0].mxu0 %v1470
          %v1472 = vpop.f32.mrb[0].mxu0
          %v1473 = vadd.f32 %v1396, %v1472
          %v1474 = vpop.f32.mrb[0].mxu0
          %v1475 = vadd.f32 %v1398, %v1474
          %1476 = vdwg.mxu0
          %v1477 = vand.u32 %v1235, 4294901760
          %1478 = vmatprep.subr.mxu0 %v1477
          %v1479 = vand.u32 %v1234, 4294901760
          %1480 = vmatpush1.msra.mxu0 %v1479
          %1481 = vmatprep.subr.mxu0 0.0
          %1482 = vmatpush1.msra.mxu0 0.0
          %1483 = vmatprep.subr.mxu0 0.0
          %1484 = vmatpush1.msra.mxu0 0.0
          %1485 = vmatprep.subr.mxu0 0.0
          %1486 = vmatpush1.msra.mxu0 0.0
          %1487 = vmatprep.subr.mxu0 0.0
          %1488 = vmatpush1.msra.mxu0 0.0
          %1489 = vmatprep.subr.mxu0 0.0
          %1490 = vmatpush1.msra.mxu0 0.0
          %1491 = vmatprep.subr.mxu0 0.0
          %1492 = vmatpush1.msra.mxu0 0.0
          %1493 = vmatprep.subr.mxu0 0.0
          %1494 = vmatpush1.msra.mxu0 0.0
          %1495 = vmatprep.subr.mxu0 0.0
          %1496 = vmatpush1.msra.mxu0 0.0
          %1497 = vmatprep.subr.mxu0 0.0
          %1498 = vmatpush1.msra.mxu0 0.0
          %1499 = vmatprep.subr.mxu0 0.0
          %1500 = vmatpush1.msra.mxu0 0.0
          %1501 = vmatprep.subr.mxu0 0.0
          %1502 = vmatpush1.msra.mxu0 0.0
          %1503 = vmatprep.subr.mxu0 0.0
          %1504 = vmatpush1.msra.mxu0 0.0
          %1505 = vmatprep.subr.mxu0 0.0
          %1506 = vmatpush1.msra.mxu0 0.0
          %1507 = vmatprep.subr.mxu0 0.0
          %1508 = vmatpush1.msra.mxu0 0.0
          %1509 = vmatprep.subr.mxu0 0.0
          %1510 = vmatpush1.msra.mxu0 0.0
          %1511 = vmatprep.subr.mxu0 0.0
          %1512 = vmatpush1.msra.mxu0 0.0
          %1513 = vmatprep.subr.mxu0 0.0
          %1514 = vmatpush1.msra.mxu0 0.0
          %1515 = vmatprep.subr.mxu0 0.0
          %1516 = vmatpush1.msra.mxu0 0.0
          %1517 = vmatprep.subr.mxu0 0.0
          %1518 = vmatpush1.msra.mxu0 0.0
          %1519 = vmatprep.subr.mxu0 0.0
          %1520 = vmatpush1.msra.mxu0 0.0
          %1521 = vmatprep.subr.mxu0 0.0
          %1522 = vmatpush1.msra.mxu0 0.0
          %1523 = vmatprep.subr.mxu0 0.0
          %1524 = vmatpush1.msra.mxu0 0.0
          %1525 = vmatprep.subr.mxu0 0.0
          %1526 = vmatpush1.msra.mxu0 0.0
          %1527 = vmatprep.subr.mxu0 0.0
          %1528 = vmatpush1.msra.mxu0 0.0
          %1529 = vmatprep.subr.mxu0 0.0
          %1530 = vmatpush1.msra.mxu0 0.0
          %1531 = vmatprep.subr.mxu0 0.0
          %1532 = vmatpush1.msra.mxu0 0.0
          %1533 = vmatprep.subr.mxu0 0.0
          %1534 = vmatpush1.msra.mxu0 0.0
          %1535 = vmatprep.subr.mxu0 0.0
          %1536 = vmatpush1.msra.mxu0 0.0
          %1537 = vmatprep.subr.mxu0 0.0
          %1538 = vmatpush1.msra.mxu0 0.0
          %1539 = vmatprep.subr.mxu0 0.0
          %1540 = vmatpush1.msra.mxu0 0.0
          %1541 = vmatprep.subr.mxu0 0.0
          %1542 = vmatpush1.msra.mxu0 0.0
          %1543 = vmatprep.mubr.f32.mxu0 0.0
          %v1544 = vand.u32 %v1238, 4294901760
          %v1545 = vsub.f32 %v1238, %v1544
          %v1546 = vand.u32 %v1545, 4294901760
          %1547 = vmatmul.mubr.f32.gmra.mrb[0].mxu0 %v1546
          %v1548 = vpop.f32.mrb[0].mxu0
          %v1549 = vadd.f32 %v1473, %v1548
          %v1550 = vpop.f32.mrb[0].mxu0
          %v1551 = vadd.f32 %v1475, %v1550
          %1552 = vdwg.mxu0
          %v1553 = vand.u32 %v1235, 4294901760
          %v1554 = vsub.f32 %v1235, %v1553
          %v1555 = vand.u32 %v1554, 4294901760
          %1556 = vmatprep.subr.mxu0 %v1555
          %v1557 = vand.u32 %v1234, 4294901760
          %v1558 = vsub.f32 %v1234, %v1557
          %v1559 = vand.u32 %v1558, 4294901760
          %1560 = vmatpush1.msra.mxu0 %v1559
          %1561 = vmatprep.subr.mxu0 0.0
          %1562 = vmatpush1.msra.mxu0 0.0
          %1563 = vmatprep.subr.mxu0 0.0
          %1564 = vmatpush1.msra.mxu0 0.0
          %1565 = vmatprep.subr.mxu0 0.0
          %1566 = vmatpush1.msra.mxu0 0.0
          %1567 = vmatprep.subr.mxu0 0.0
          %1568 = vmatpush1.msra.mxu0 0.0
          %1569 = vmatprep.subr.mxu0 0.0
          %1570 = vmatpush1.msra.mxu0 0.0
          %1571 = vmatprep.subr.mxu0 0.0
          %1572 = vmatpush1.msra.mxu0 0.0
          %1573 = vmatprep.subr.mxu0 0.0
          %1574 = vmatpush1.msra.mxu0 0.0
          %1575 = vmatprep.subr.mxu0 0.0
          %1576 = vmatpush1.msra.mxu0 0.0
          %1577 = vmatprep.subr.mxu0 0.0
          %1578 = vmatpush1.msra.mxu0 0.0
          %1579 = vmatprep.subr.mxu0 0.0
          %1580 = vmatpush1.msra.mxu0 0.0
          %1581 = vmatprep.subr.mxu0 0.0
          %1582 = vmatpush1.msra.mxu0 0.0
          %1583 = vmatprep.subr.mxu0 0.0
          %1584 = vmatpush1.msra.mxu0 0.0
          %1585 = vmatprep.subr.mxu0 0.0
          %1586 = vmatpush1.msra.mxu0 0.0
          %1587 = vmatprep.subr.mxu0 0.0
          %1588 = vmatpush1.msra.mxu0 0.0
          %1589 = vmatprep.subr.mxu0 0.0
          %1590 = vmatpush1.msra.mxu0 0.0
          %1591 = vmatprep.subr.mxu0 0.0
          %1592 = vmatpush1.msra.mxu0 0.0
          %1593 = vmatprep.subr.mxu0 0.0
          %1594 = vmatpush1.msra.mxu0 0.0
          %1595 = vmatprep.subr.mxu0 0.0
          %1596 = vmatpush1.msra.mxu0 0.0
          %1597 = vmatprep.subr.mxu0 0.0
          %1598 = vmatpush1.msra.mxu0 0.0
          %1599 = vmatprep.subr.mxu0 0.0
          %1600 = vmatpush1.msra.mxu0 0.0
          %1601 = vmatprep.subr.mxu0 0.0
          %1602 = vmatpush1.msra.mxu0 0.0
          %1603 = vmatprep.subr.mxu0 0.0
          %1604 = vmatpush1.msra.mxu0 0.0
          %1605 = vmatprep.subr.mxu0 0.0
          %1606 = vmatpush1.msra.mxu0 0.0
          %1607 = vmatprep.subr.mxu0 0.0
          %1608 = vmatpush1.msra.mxu0 0.0
          %1609 = vmatprep.subr.mxu0 0.0
          %1610 = vmatpush1.msra.mxu0 0.0
          %1611 = vmatprep.subr.mxu0 0.0
          %1612 = vmatpush1.msra.mxu0 0.0
          %1613 = vmatprep.subr.mxu0 0.0
          %1614 = vmatpush1.msra.mxu0 0.0
          %1615 = vmatprep.subr.mxu0 0.0
          %1616 = vmatpush1.msra.mxu0 0.0
          %1617 = vmatprep.subr.mxu0 0.0
          %1618 = vmatpush1.msra.mxu0 0.0
          %1619 = vmatprep.subr.mxu0 0.0
          %1620 = vmatpush1.msra.mxu0 0.0
          %1621 = vmatprep.subr.mxu0 0.0
          %1622 = vmatpush1.msra.mxu0 0.0
          %1623 = vmatprep.mubr.f32.mxu0 0.0
          %v1624 = vand.u32 %v1238, 4294901760
          %1625 = vmatmul.mubr.f32.gmra.mrb[0].mxu0 %v1624
          %v1626 = vpop.f32.mrb[0].mxu0
          %v1627 = vadd.f32 %v1549, %v1626
          %v1628 = vpop.f32.mrb[0].mxu0
          %v1629 = vadd.f32 %v1551, %v1628
          %1630 = vdwg.mxu0
          %v1631 = vand.u32 %v1235, 4294901760
          %1632 = vmatprep.subr.mxu0 %v1631
          %v1633 = vand.u32 %v1234, 4294901760
          %1634 = vmatpush1.msra.mxu0 %v1633
          %1635 = vmatprep.subr.mxu0 0.0
          %1636 = vmatpush1.msra.mxu0 0.0
          %1637 = vmatprep.subr.mxu0 0.0
          %1638 = vmatpush1.msra.mxu0 0.0
          %1639 = vmatprep.subr.mxu0 0.0
          %1640 = vmatpush1.msra.mxu0 0.0
          %1641 = vmatprep.subr.mxu0 0.0
          %1642 = vmatpush1.msra.mxu0 0.0
          %1643 = vmatprep.subr.mxu0 0.0
          %1644 = vmatpush1.msra.mxu0 0.0
          %1645 = vmatprep.subr.mxu0 0.0
          %1646 = vmatpush1.msra.mxu0 0.0
          %1647 = vmatprep.subr.mxu0 0.0
          %1648 = vmatpush1.msra.mxu0 0.0
          %1649 = vmatprep.subr.mxu0 0.0
          %1650 = vmatpush1.msra.mxu0 0.0
          %1651 = vmatprep.subr.mxu0 0.0
          %1652 = vmatpush1.msra.mxu0 0.0
          %1653 = vmatprep.subr.mxu0 0.0
          %1654 = vmatpush1.msra.mxu0 0.0
          %1655 = vmatprep.subr.mxu0 0.0
          %1656 = vmatpush1.msra.mxu0 0.0
          %1657 = vmatprep.subr.mxu0 0.0
          %1658 = vmatpush1.msra.mxu0 0.0
          %1659 = vmatprep.subr.mxu0 0.0
          %1660 = vmatpush1.msra.mxu0 0.0
          %1661 = vmatprep.subr.mxu0 0.0
          %1662 = vmatpush1.msra.mxu0 0.0
          %1663 = vmatprep.subr.mxu0 0.0
          %1664 = vmatpush1.msra.mxu0 0.0
          %1665 = vmatprep.subr.mxu0 0.0
          %1666 = vmatpush1.msra.mxu0 0.0
          %1667 = vmatprep.subr.mxu0 0.0
          %1668 = vmatpush1.msra.mxu0 0.0
          %1669 = vmatprep.subr.mxu0 0.0
          %1670 = vmatpush1.msra.mxu0 0.0
          %1671 = vmatprep.subr.mxu0 0.0
          %1672 = vmatpush1.msra.mxu0 0.0
          %1673 = vmatprep.subr.mxu0 0.0
          %1674 = vmatpush1.msra.mxu0 0.0
          %1675 = vmatprep.subr.mxu0 0.0
          %1676 = vmatpush1.msra.mxu0 0.0
          %1677 = vmatprep.subr.mxu0 0.0
          %1678 = vmatpush1.msra.mxu0 0.0
          %1679 = vmatprep.subr.mxu0 0.0
          %1680 = vmatpush1.msra.mxu0 0.0
          %1681 = vmatprep.subr.mxu0 0.0
          %1682 = vmatpush1.msra.mxu0 0.0
          %1683 = vmatprep.subr.mxu0 0.0
          %1684 = vmatpush1.msra.mxu0 0.0
          %1685 = vmatprep.subr.mxu0 0.0
          %1686 = vmatpush1.msra.mxu0 0.0
          %1687 = vmatprep.subr.mxu0 0.0
          %1688 = vmatpush1.msra.mxu0 0.0
          %1689 = vmatprep.subr.mxu0 0.0
          %1690 = vmatpush1.msra.mxu0 0.0
          %1691 = vmatprep.subr.mxu0 0.0
          %1692 = vmatpush1.msra.mxu0 0.0
          %1693 = vmatprep.subr.mxu0 0.0
          %1694 = vmatpush1.msra.mxu0 0.0
          %1695 = vmatprep.subr.mxu0 0.0
          %1696 = vmatpush1.msra.mxu0 0.0
          %1697 = vmatprep.mubr.f32.mxu0 0.0
          %v1698 = vand.u32 %v1238, 4294901760
          %1699 = vmatmul.mubr.f32.gmra.mrb[0].mxu0 %v1698
          %v1700 = vpop.f32.mrb[0].mxu0
          %v1701 = vadd.f32 %v1627, %v1700
          %v1702 = vpop.f32.mrb[0].mxu0
          %v1703 = vadd.f32 %v1629, %v1702
          %1704 = vdwg.mxu0
          %v1705 = vmax.f32 %v1701, 0.0
          %v1706 = vmax.f32 %v1703, 0.0
          %1707 = vrot.lane.b32.xlu0 %v214, 102
          %v1708 = vpop.permute.xlu0 %1707
          %v1709 = vsel %vm295, %v1708, 0
          %v1711 = vand.u32 %v1706, 4294901760
          %1712 = vmatprep.subr.mxu0 %v1711
          %v1713 = vand.u32 %v1705, 4294901760
          %1714 = vmatpush1.msra.mxu0 %v1713
          %1715 = vmatprep.subr.mxu0 0.0
          %1716 = vmatpush1.msra.mxu0 0.0
          %1717 = vmatprep.subr.mxu0 0.0
          %1718 = vmatpush1.msra.mxu0 0.0
          %1719 = vmatprep.subr.mxu0 0.0
          %1720 = vmatpush1.msra.mxu0 0.0
          %1721 = vmatprep.subr.mxu0 0.0
          %1722 = vmatpush1.msra.mxu0 0.0
          %1723 = vmatprep.subr.mxu0 0.0
          %1724 = vmatpush1.msra.mxu0 0.0
          %1725 = vmatprep.subr.mxu0 0.0
          %1726 = vmatpush1.msra.mxu0 0.0
          %1727 = vmatprep.subr.mxu0 0.0
          %1728 = vmatpush1.msra.mxu0 0.0
          %1729 = vmatprep.subr.mxu0 0.0
          %1730 = vmatpush1.msra.mxu0 0.0
          %1731 = vmatprep.subr.mxu0 0.0
          %1732 = vmatpush1.msra.mxu0 0.0
          %1733 = vmatprep.subr.mxu0 0.0
          %1734 = vmatpush1.msra.mxu0 0.0
          %1735 = vmatprep.subr.mxu0 0.0
          %1736 = vmatpush1.msra.mxu0 0.0
          %1737 = vmatprep.subr.mxu0 0.0
          %1738 = vmatpush1.msra.mxu0 0.0
          %1739 = vmatprep.subr.mxu0 0.0
          %1740 = vmatpush1.msra.mxu0 0.0
          %1741 = vmatprep.subr.mxu0 0.0
          %1742 = vmatpush1.msra.mxu0 0.0
          %1743 = vmatprep.subr.mxu0 0.0
          %1744 = vmatpush1.msra.mxu0 0.0
          %1745 = vmatprep.subr.mxu0 0.0
          %1746 = vmatpush1.msra.mxu0 0.0
          %1747 = vmatprep.subr.mxu0 0.0
          %1748 = vmatpush1.msra.mxu0 0.0
          %1749 = vmatprep.subr.mxu0 0.0
          %1750 = vmatpush1.msra.mxu0 0.0
          %1751 = vmatprep.subr.mxu0 0.0
          %1752 = vmatpush1.msra.mxu0 0.0
          %1753 = vmatprep.subr.mxu0 0.0
          %1754 = vmatpush1.msra.mxu0 0.0
          %1755 = vmatprep.subr.mxu0 0.0
          %1756 = vmatpush1.msra.mxu0 0.0
          %1757 = vmatprep.subr.mxu0 0.0
          %1758 = vmatpush1.msra.mxu0 0.0
          %1759 = vmatprep.subr.mxu0 0.0
          %1760 = vmatpush1.msra.mxu0 0.0
          %1761 = vmatprep.subr.mxu0 0.0
          %1762 = vmatpush1.msra.mxu0 0.0
          %1763 = vmatprep.subr.mxu0 0.0
          %1764 = vmatpush1.msra.mxu0 0.0
          %1765 = vmatprep.subr.mxu0 0.0
          %1766 = vmatpush1.msra.mxu0 0.0
          %1767 = vmatprep.subr.mxu0 0.0
          %1768 = vmatpush1.msra.mxu0 0.0
          %1769 = vmatprep.subr.mxu0 0.0
          %1770 = vmatpush1.msra.mxu0 0.0
          %1771 = vmatprep.subr.mxu0 0.0
          %1772 = vmatpush1.msra.mxu0 0.0
          %1773 = vmatprep.subr.mxu0 0.0
          %1774 = vmatpush1.msra.mxu0 0.0
          %1775 = vmatprep.subr.mxu0 0.0
          %1776 = vmatpush1.msra.mxu0 0.0
          %1777 = vmatprep.mubr.f32.mxu0 0.0
          %v1778 = vand.u32 %v1709, 4294901760
          %v1779 = vsub.f32 %v1709, %v1778
          %v1780 = vand.u32 %v1779, 4294901760
          %v1781 = vsub.f32 %v1779, %v1780
          %v1782 = vand.u32 %v1781, 4294901760
          %1783 = vmatmul.mubr.f32.gmra.mrb[0].mxu0 %v1782
          %v1784 = vpop.f32.mrb[0].mxu0
          %v1785 = vadd.f32 %v244, %v1784
          %v1786 = vpop.f32.mrb[0].mxu0
          %v1787 = vadd.f32 %v244, %v1786
          %1788 = vdwg.mxu0
          %v1789 = vand.u32 %v1706, 4294901760
          %v1790 = vsub.f32 %v1706, %v1789
          %v1791 = vand.u32 %v1790, 4294901760
          %v1792 = vsub.f32 %v1790, %v1791
          %v1793 = vand.u32 %v1792, 4294901760
          %1794 = vmatprep.subr.mxu0 %v1793
          %v1795 = vand.u32 %v1705, 4294901760
          %v1796 = vsub.f32 %v1705, %v1795
          %v1797 = vand.u32 %v1796, 4294901760
          %v1798 = vsub.f32 %v1796, %v1797
          %v1799 = vand.u32 %v1798, 4294901760
          %1800 = vmatpush1.msra.mxu0 %v1799
          %1801 = vmatprep.subr.mxu0 0.0
          %1802 = vmatpush1.msra.mxu0 0.0
          %1803 = vmatprep.subr.mxu0 0.0
          %1804 = vmatpush1.msra.mxu0 0.0
          %1805 = vmatprep.subr.mxu0 0.0
          %1806 = vmatpush1.msra.mxu0 0.0
          %1807 = vmatprep.subr.mxu0 0.0
          %1808 = vmatpush1.msra.mxu0 0.0
          %1809 = vmatprep.subr.mxu0 0.0
          %1810 = vmatpush1.msra.mxu0 0.0
          %1811 = vmatprep.subr.mxu0 0.0
          %1812 = vmatpush1.msra.mxu0 0.0
          %1813 = vmatprep.subr.mxu0 0.0
          %1814 = vmatpush1.msra.mxu0 0.0
          %1815 = vmatprep.subr.mxu0 0.0
          %1816 = vmatpush1.msra.mxu0 0.0
          %1817 = vmatprep.subr.mxu0 0.0
          %1818 = vmatpush1.msra.mxu0 0.0
          %1819 = vmatprep.subr.mxu0 0.0
          %1820 = vmatpush1.msra.mxu0 0.0
          %1821 = vmatprep.subr.mxu0 0.0
          %1822 = vmatpush1.msra.mxu0 0.0
          %1823 = vmatprep.subr.mxu0 0.0
          %1824 = vmatpush1.msra.mxu0 0.0
          %1825 = vmatprep.subr.mxu0 0.0
          %1826 = vmatpush1.msra.mxu0 0.0
          %1827 = vmatprep.subr.mxu0 0.0
          %1828 = vmatpush1.msra.mxu0 0.0
          %1829 = vmatprep.subr.mxu0 0.0
          %1830 = vmatpush1.msra.mxu0 0.0
          %1831 = vmatprep.subr.mxu0 0.0
          %1832 = vmatpush1.msra.mxu0 0.0
          %1833 = vmatprep.subr.mxu0 0.0
          %1834 = vmatpush1.msra.mxu0 0.0
          %1835 = vmatprep.subr.mxu0 0.0
          %1836 = vmatpush1.msra.mxu0 0.0
          %1837 = vmatprep.subr.mxu0 0.0
          %1838 = vmatpush1.msra.mxu0 0.0
          %1839 = vmatprep.subr.mxu0 0.0
          %1840 = vmatpush1.msra.mxu0 0.0
          %1841 = vmatprep.subr.mxu0 0.0
          %1842 = vmatpush1.msra.mxu0 0.0
          %1843 = vmatprep.subr.mxu0 0.0
          %1844 = vmatpush1.msra.mxu0 0.0
          %1845 = vmatprep.subr.mxu0 0.0
          %1846 = vmatpush1.msra.mxu0 0.0
          %1847 = vmatprep.subr.mxu0 0.0
          %1848 = vmatpush1.msra.mxu0 0.0
          %1849 = vmatprep.subr.mxu0 0.0
          %1850 = vmatpush1.msra.mxu0 0.0
          %1851 = vmatprep.subr.mxu0 0.0
          %1852 = vmatpush1.msra.mxu0 0.0
          %1853 = vmatprep.subr.mxu0 0.0
          %1854 = vmatpush1.msra.mxu0 0.0
          %1855 = vmatprep.subr.mxu0 0.0
          %1856 = vmatpush1.msra.mxu0 0.0
          %1857 = vmatprep.subr.mxu0 0.0
          %1858 = vmatpush1.msra.mxu0 0.0
          %1859 = vmatprep.subr.mxu0 0.0
          %1860 = vmatpush1.msra.mxu0 0.0
          %1861 = vmatprep.subr.mxu0 0.0
          %1862 = vmatpush1.msra.mxu0 0.0
          %1863 = vmatprep.mubr.f32.mxu0 0.0
          %v1864 = vand.u32 %v1709, 4294901760
          %1865 = vmatmul.mubr.f32.gmra.mrb[0].mxu0 %v1864
          %v1866 = vpop.f32.mrb[0].mxu0
          %v1867 = vadd.f32 %v1785, %v1866
          %v1868 = vpop.f32.mrb[0].mxu0
          %v1869 = vadd.f32 %v1787, %v1868
          %1870 = vdwg.mxu0
          %v1871 = vand.u32 %v1706, 4294901760
          %v1872 = vsub.f32 %v1706, %v1871
          %1873 = vmatprep.subr.mxu0 %v1872
          %v1874 = vand.u32 %v1705, 4294901760
          %v1875 = vsub.f32 %v1705, %v1874
          %1876 = vmatpush1.msra.mxu0 %v1875
          %1877 = vmatprep.subr.mxu0 0.0
          %1878 = vmatpush1.msra.mxu0 0.0
          %1879 = vmatprep.subr.mxu0 0.0
          %1880 = vmatpush1.msra.mxu0 0.0
          %1881 = vmatprep.subr.mxu0 0.0
          %1882 = vmatpush1.msra.mxu0 0.0
          %1883 = vmatprep.subr.mxu0 0.0
          %1884 = vmatpush1.msra.mxu0 0.0
          %1885 = vmatprep.subr.mxu0 0.0
          %1886 = vmatpush1.msra.mxu0 0.0
          %1887 = vmatprep.subr.mxu0 0.0
          %1888 = vmatpush1.msra.mxu0 0.0
          %1889 = vmatprep.subr.mxu0 0.0
          %1890 = vmatpush1.msra.mxu0 0.0
          %1891 = vmatprep.subr.mxu0 0.0
          %1892 = vmatpush1.msra.mxu0 0.0
          %1893 = vmatprep.subr.mxu0 0.0
          %1894 = vmatpush1.msra.mxu0 0.0
          %1895 = vmatprep.subr.mxu0 0.0
          %1896 = vmatpush1.msra.mxu0 0.0
          %1897 = vmatprep.subr.mxu0 0.0
          %1898 = vmatpush1.msra.mxu0 0.0
          %1899 = vmatprep.subr.mxu0 0.0
          %1900 = vmatpush1.msra.mxu0 0.0
          %1901 = vmatprep.subr.mxu0 0.0
          %1902 = vmatpush1.msra.mxu0 0.0
          %1903 = vmatprep.subr.mxu0 0.0
          %1904 = vmatpush1.msra.mxu0 0.0
          %1905 = vmatprep.subr.mxu0 0.0
          %1906 = vmatpush1.msra.mxu0 0.0
          %1907 = vmatprep.subr.mxu0 0.0
          %1908 = vmatpush1.msra.mxu0 0.0
          %1909 = vmatprep.subr.mxu0 0.0
          %1910 = vmatpush1.msra.mxu0 0.0
          %1911 = vmatprep.subr.mxu0 0.0
          %1912 = vmatpush1.msra.mxu0 0.0
          %1913 = vmatprep.subr.mxu0 0.0
          %1914 = vmatpush1.msra.mxu0 0.0
          %1915 = vmatprep.subr.mxu0 0.0
          %1916 = vmatpush1.msra.mxu0 0.0
          %1917 = vmatprep.subr.mxu0 0.0
          %1918 = vmatpush1.msra.mxu0 0.0
          %1919 = vmatprep.subr.mxu0 0.0
          %1920 = vmatpush1.msra.mxu0 0.0
          %1921 = vmatprep.subr.mxu0 0.0
          %1922 = vmatpush1.msra.mxu0 0.0
          %1923 = vmatprep.subr.mxu0 0.0
          %1924 = vmatpush1.msra.mxu0 0.0
          %1925 = vmatprep.subr.mxu0 0.0
          %1926 = vmatpush1.msra.mxu0 0.0
          %1927 = vmatprep.subr.mxu0 0.0
          %1928 = vmatpush1.msra.mxu0 0.0
          %1929 = vmatprep.subr.mxu0 0.0
          %1930 = vmatpush1.msra.mxu0 0.0
          %1931 = vmatprep.subr.mxu0 0.0
          %1932 = vmatpush1.msra.mxu0 0.0
          %1933 = vmatprep.subr.mxu0 0.0
          %1934 = vmatpush1.msra.mxu0 0.0
          %1935 = vmatprep.subr.mxu0 0.0
          %1936 = vmatpush1.msra.mxu0 0.0
          %1937 = vmatprep.subr.mxu0 0.0
          %1938 = vmatpush1.msra.mxu0 0.0
          %1939 = vmatprep.mubr.f32.mxu0 0.0
          %v1940 = vand.u32 %v1709, 4294901760
          %v1941 = vsub.f32 %v1709, %v1940
          %1942 = vmatmul.mubr.f32.gmra.mrb[0].mxu0 %v1941
          %v1943 = vpop.f32.mrb[0].mxu0
          %v1944 = vadd.f32 %v1867, %v1943
          %v1945 = vpop.f32.mrb[0].mxu0
          %v1946 = vadd.f32 %v1869, %v1945
          %1947 = vdwg.mxu0
          %v1948 = vand.u32 %v1706, 4294901760
          %1949 = vmatprep.subr.mxu0 %v1948
          %v1950 = vand.u32 %v1705, 4294901760
          %1951 = vmatpush1.msra.mxu0 %v1950
          %1952 = vmatprep.subr.mxu0 0.0
          %1953 = vmatpush1.msra.mxu0 0.0
          %1954 = vmatprep.subr.mxu0 0.0
          %1955 = vmatpush1.msra.mxu0 0.0
          %1956 = vmatprep.subr.mxu0 0.0
          %1957 = vmatpush1.msra.mxu0 0.0
          %1958 = vmatprep.subr.mxu0 0.0
          %1959 = vmatpush1.msra.mxu0 0.0
          %1960 = vmatprep.subr.mxu0 0.0
          %1961 = vmatpush1.msra.mxu0 0.0
          %1962 = vmatprep.subr.mxu0 0.0
          %1963 = vmatpush1.msra.mxu0 0.0
          %1964 = vmatprep.subr.mxu0 0.0
          %1965 = vmatpush1.msra.mxu0 0.0
          %1966 = vmatprep.subr.mxu0 0.0
          %1967 = vmatpush1.msra.mxu0 0.0
          %1968 = vmatprep.subr.mxu0 0.0
          %1969 = vmatpush1.msra.mxu0 0.0
          %1970 = vmatprep.subr.mxu0 0.0
          %1971 = vmatpush1.msra.mxu0 0.0
          %1972 = vmatprep.subr.mxu0 0.0
          %1973 = vmatpush1.msra.mxu0 0.0
          %1974 = vmatprep.subr.mxu0 0.0
          %1975 = vmatpush1.msra.mxu0 0.0
          %1976 = vmatprep.subr.mxu0 0.0
          %1977 = vmatpush1.msra.mxu0 0.0
          %1978 = vmatprep.subr.mxu0 0.0
          %1979 = vmatpush1.msra.mxu0 0.0
          %1980 = vmatprep.subr.mxu0 0.0
          %1981 = vmatpush1.msra.mxu0 0.0
          %1982 = vmatprep.subr.mxu0 0.0
          %1983 = vmatpush1.msra.mxu0 0.0
          %1984 = vmatprep.subr.mxu0 0.0
          %1985 = vmatpush1.msra.mxu0 0.0
          %1986 = vmatprep.subr.mxu0 0.0
          %1987 = vmatpush1.msra.mxu0 0.0
          %1988 = vmatprep.subr.mxu0 0.0
          %1989 = vmatpush1.msra.mxu0 0.0
          %1990 = vmatprep.subr.mxu0 0.0
          %1991 = vmatpush1.msra.mxu0 0.0
          %1992 = vmatprep.subr.mxu0 0.0
          %1993 = vmatpush1.msra.mxu0 0.0
          %1994 = vmatprep.subr.mxu0 0.0
          %1995 = vmatpush1.msra.mxu0 0.0
          %1996 = vmatprep.subr.mxu0 0.0
          %1997 = vmatpush1.msra.mxu0 0.0
          %1998 = vmatprep.subr.mxu0 0.0
          %1999 = vmatpush1.msra.mxu0 0.0
          %2000 = vmatprep.subr.mxu0 0.0
          %2001 = vmatpush1.msra.mxu0 0.0
          %2002 = vmatprep.subr.mxu0 0.0
          %2003 = vmatpush1.msra.mxu0 0.0
          %2004 = vmatprep.subr.mxu0 0.0
          %2005 = vmatpush1.msra.mxu0 0.0
          %2006 = vmatprep.subr.mxu0 0.0
          %2007 = vmatpush1.msra.mxu0 0.0
          %2008 = vmatprep.subr.mxu0 0.0
          %2009 = vmatpush1.msra.mxu0 0.0
          %2010 = vmatprep.subr.mxu0 0.0
          %2011 = vmatpush1.msra.mxu0 0.0
          %2012 = vmatprep.subr.mxu0 0.0
          %2013 = vmatpush1.msra.mxu0 0.0
          %2014 = vmatprep.mubr.f32.mxu0 0.0
          %v2015 = vand.u32 %v1709, 4294901760
          %v2016 = vsub.f32 %v1709, %v2015
          %v2017 = vand.u32 %v2016, 4294901760
          %2018 = vmatmul.mubr.f32.gmra.mrb[0].mxu0 %v2017
          %v2019 = vpop.f32.mrb[0].mxu0
          %v2020 = vadd.f32 %v1944, %v2019
          %v2021 = vpop.f32.mrb[0].mxu0
          %v2022 = vadd.f32 %v1946, %v2021
          %2023 = vdwg.mxu0
          %v2024 = vand.u32 %v1706, 4294901760
          %v2025 = vsub.f32 %v1706, %v2024
          %v2026 = vand.u32 %v2025, 4294901760
          %2027 = vmatprep.subr.mxu0 %v2026
          %v2028 = vand.u32 %v1705, 4294901760
          %v2029 = vsub.f32 %v1705, %v2028
          %v2030 = vand.u32 %v2029, 4294901760
          %2031 = vmatpush1.msra.mxu0 %v2030
          %2032 = vmatprep.subr.mxu0 0.0
          %2033 = vmatpush1.msra.mxu0 0.0
          %2034 = vmatprep.subr.mxu0 0.0
          %2035 = vmatpush1.msra.mxu0 0.0
          %2036 = vmatprep.subr.mxu0 0.0
          %2037 = vmatpush1.msra.mxu0 0.0
          %2038 = vmatprep.subr.mxu0 0.0
          %2039 = vmatpush1.msra.mxu0 0.0
          %2040 = vmatprep.subr.mxu0 0.0
          %2041 = vmatpush1.msra.mxu0 0.0
          %2042 = vmatprep.subr.mxu0 0.0
          %2043 = vmatpush1.msra.mxu0 0.0
          %2044 = vmatprep.subr.mxu0 0.0
          %2045 = vmatpush1.msra.mxu0 0.0
          %2046 = vmatprep.subr.mxu0 0.0
          %2047 = vmatpush1.msra.mxu0 0.0
          %2048 = vmatprep.subr.mxu0 0.0
          %2049 = vmatpush1.msra.mxu0 0.0
          %2050 = vmatprep.subr.mxu0 0.0
          %2051 = vmatpush1.msra.mxu0 0.0
          %2052 = vmatprep.subr.mxu0 0.0
          %2053 = vmatpush1.msra.mxu0 0.0
          %2054 = vmatprep.subr.mxu0 0.0
          %2055 = vmatpush1.msra.mxu0 0.0
          %2056 = vmatprep.subr.mxu0 0.0
          %2057 = vmatpush1.msra.mxu0 0.0
          %2058 = vmatprep.subr.mxu0 0.0
          %2059 = vmatpush1.msra.mxu0 0.0
          %2060 = vmatprep.subr.mxu0 0.0
          %2061 = vmatpush1.msra.mxu0 0.0
          %2062 = vmatprep.subr.mxu0 0.0
          %2063 = vmatpush1.msra.mxu0 0.0
          %2064 = vmatprep.subr.mxu0 0.0
          %2065 = vmatpush1.msra.mxu0 0.0
          %2066 = vmatprep.subr.mxu0 0.0
          %2067 = vmatpush1.msra.mxu0 0.0
          %2068 = vmatprep.subr.mxu0 0.0
          %2069 = vmatpush1.msra.mxu0 0.0
          %2070 = vmatprep.subr.mxu0 0.0
          %2071 = vmatpush1.msra.mxu0 0.0
          %2072 = vmatprep.subr.mxu0 0.0
          %2073 = vmatpush1.msra.mxu0 0.0
          %2074 = vmatprep.subr.mxu0 0.0
          %2075 = vmatpush1.msra.mxu0 0.0
          %2076 = vmatprep.subr.mxu0 0.0
          %2077 = vmatpush1.msra.mxu0 0.0
          %2078 = vmatprep.subr.mxu0 0.0
          %2079 = vmatpush1.msra.mxu0 0.0
          %2080 = vmatprep.subr.mxu0 0.0
          %2081 = vmatpush1.msra.mxu0 0.0
          %2082 = vmatprep.subr.mxu0 0.0
          %2083 = vmatpush1.msra.mxu0 0.0
          %2084 = vmatprep.subr.mxu0 0.0
          %2085 = vmatpush1.msra.mxu0 0.0
          %2086 = vmatprep.subr.mxu0 0.0
          %2087 = vmatpush1.msra.mxu0 0.0
          %2088 = vmatprep.subr.mxu0 0.0
          %2089 = vmatpush1.msra.mxu0 0.0
          %2090 = vmatprep.subr.mxu0 0.0
          %2091 = vmatpush1.msra.mxu0 0.0
          %2092 = vmatprep.subr.mxu0 0.0
          %2093 = vmatpush1.msra.mxu0 0.0
          %2094 = vmatprep.mubr.f32.mxu0 0.0
          %v2095 = vand.u32 %v1709, 4294901760
          %2096 = vmatmul.mubr.f32.gmra.mrb[0].mxu0 %v2095
          %v2097 = vpop.f32.mrb[0].mxu0
          %v2098 = vadd.f32 %v2020, %v2097
          %v2099 = vpop.f32.mrb[0].mxu0
          %v2100 = vadd.f32 %v2022, %v2099
          %2101 = vdwg.mxu0
          %v2102 = vand.u32 %v1706, 4294901760
          %2103 = vmatprep.subr.mxu0 %v2102
          %v2104 = vand.u32 %v1705, 4294901760
          %2105 = vmatpush1.msra.mxu0 %v2104
          %2106 = vmatprep.subr.mxu0 0.0
          %2107 = vmatpush1.msra.mxu0 0.0
          %2108 = vmatprep.subr.mxu0 0.0
          %2109 = vmatpush1.msra.mxu0 0.0
          %2110 = vmatprep.subr.mxu0 0.0
          %2111 = vmatpush1.msra.mxu0 0.0
          %2112 = vmatprep.subr.mxu0 0.0
          %2113 = vmatpush1.msra.mxu0 0.0
          %2114 = vmatprep.subr.mxu0 0.0
          %2115 = vmatpush1.msra.mxu0 0.0
          %2116 = vmatprep.subr.mxu0 0.0
          %2117 = vmatpush1.msra.mxu0 0.0
          %2118 = vmatprep.subr.mxu0 0.0
          %2119 = vmatpush1.msra.mxu0 0.0
          %2120 = vmatprep.subr.mxu0 0.0
          %2121 = vmatpush1.msra.mxu0 0.0
          %2122 = vmatprep.subr.mxu0 0.0
          %2123 = vmatpush1.msra.mxu0 0.0
          %2124 = vmatprep.subr.mxu0 0.0
          %2125 = vmatpush1.msra.mxu0 0.0
          %2126 = vmatprep.subr.mxu0 0.0
          %2127 = vmatpush1.msra.mxu0 0.0
          %2128 = vmatprep.subr.mxu0 0.0
          %2129 = vmatpush1.msra.mxu0 0.0
          %2130 = vmatprep.subr.mxu0 0.0
          %2131 = vmatpush1.msra.mxu0 0.0
          %2132 = vmatprep.subr.mxu0 0.0
          %2133 = vmatpush1.msra.mxu0 0.0
          %2134 = vmatprep.subr.mxu0 0.0
          %2135 = vmatpush1.msra.mxu0 0.0
          %2136 = vmatprep.subr.mxu0 0.0
          %2137 = vmatpush1.msra.mxu0 0.0
          %2138 = vmatprep.subr.mxu0 0.0
          %2139 = vmatpush1.msra.mxu0 0.0
          %2140 = vmatprep.subr.mxu0 0.0
          %2141 = vmatpush1.msra.mxu0 0.0
          %2142 = vmatprep.subr.mxu0 0.0
          %2143 = vmatpush1.msra.mxu0 0.0
          %2144 = vmatprep.subr.mxu0 0.0
          %2145 = vmatpush1.msra.mxu0 0.0
          %2146 = vmatprep.subr.mxu0 0.0
          %2147 = vmatpush1.msra.mxu0 0.0
          %2148 = vmatprep.subr.mxu0 0.0
          %2149 = vmatpush1.msra.mxu0 0.0
          %2150 = vmatprep.subr.mxu0 0.0
          %2151 = vmatpush1.msra.mxu0 0.0
          %2152 = vmatprep.subr.mxu0 0.0
          %2153 = vmatpush1.msra.mxu0 0.0
          %2154 = vmatprep.subr.mxu0 0.0
          %2155 = vmatpush1.msra.mxu0 0.0
          %2156 = vmatprep.subr.mxu0 0.0
          %2157 = vmatpush1.msra.mxu0 0.0
          %2158 = vmatprep.subr.mxu0 0.0
          %2159 = vmatpush1.msra.mxu0 0.0
          %2160 = vmatprep.subr.mxu0 0.0
          %2161 = vmatpush1.msra.mxu0 0.0
          %2162 = vmatprep.subr.mxu0 0.0
          %2163 = vmatpush1.msra.mxu0 0.0
          %2164 = vmatprep.subr.mxu0 0.0
          %2165 = vmatpush1.msra.mxu0 0.0
          %2166 = vmatprep.subr.mxu0 0.0
          %2167 = vmatpush1.msra.mxu0 0.0
          %2168 = vmatprep.mubr.f32.mxu0 0.0
          %v2169 = vand.u32 %v1709, 4294901760
          %2170 = vmatmul.mubr.f32.gmra.mrb[0].mxu0 %v2169
          %v2171 = vpop.f32.mrb[0].mxu0
          %v2172 = vadd.f32 %v2098, %v2171
          %v2173 = vpop.f32.mrb[0].mxu0
          %v2174 = vadd.f32 %v2100, %v2173
          %2175 = vdwg.mxu0
          %v2176 = vmax.f32 %v2172, 0.0
          %v2177 = vmax.f32 %v2174, 0.0
          %2178 = vrot.lane.b32.xlu0 %v214, 94
          %v2179 = vpop.permute.xlu0 %2178
          %v2180 = vsel %vm295, %v2179, 0
          %v2182 = vand.u32 %v2177, 4294901760
          %2183 = vmatprep.subr.mxu0 %v2182
          %v2184 = vand.u32 %v2176, 4294901760
          %2185 = vmatpush1.msra.mxu0 %v2184
          %2186 = vmatprep.subr.mxu0 0.0
          %2187 = vmatpush1.msra.mxu0 0.0
          %2188 = vmatprep.subr.mxu0 0.0
          %2189 = vmatpush1.msra.mxu0 0.0
          %2190 = vmatprep.subr.mxu0 0.0
          %2191 = vmatpush1.msra.mxu0 0.0
          %2192 = vmatprep.subr.mxu0 0.0
          %2193 = vmatpush1.msra.mxu0 0.0
          %2194 = vmatprep.subr.mxu0 0.0
          %2195 = vmatpush1.msra.mxu0 0.0
          %2196 = vmatprep.subr.mxu0 0.0
          %2197 = vmatpush1.msra.mxu0 0.0
          %2198 = vmatprep.subr.mxu0 0.0
          %2199 = vmatpush1.msra.mxu0 0.0
          %2200 = vmatprep.subr.mxu0 0.0
          %2201 = vmatpush1.msra.mxu0 0.0
          %2202 = vmatprep.subr.mxu0 0.0
          %2203 = vmatpush1.msra.mxu0 0.0
          %2204 = vmatprep.subr.mxu0 0.0
          %2205 = vmatpush1.msra.mxu0 0.0
          %2206 = vmatprep.subr.mxu0 0.0
          %2207 = vmatpush1.msra.mxu0 0.0
          %2208 = vmatprep.subr.mxu0 0.0
          %2209 = vmatpush1.msra.mxu0 0.0
          %2210 = vmatprep.subr.mxu0 0.0
          %2211 = vmatpush1.msra.mxu0 0.0
          %2212 = vmatprep.subr.mxu0 0.0
          %2213 = vmatpush1.msra.mxu0 0.0
          %2214 = vmatprep.subr.mxu0 0.0
          %2215 = vmatpush1.msra.mxu0 0.0
          %2216 = vmatprep.subr.mxu0 0.0
          %2217 = vmatpush1.msra.mxu0 0.0
          %2218 = vmatprep.subr.mxu0 0.0
          %2219 = vmatpush1.msra.mxu0 0.0
          %2220 = vmatprep.subr.mxu0 0.0
          %2221 = vmatpush1.msra.mxu0 0.0
          %2222 = vmatprep.subr.mxu0 0.0
          %2223 = vmatpush1.msra.mxu0 0.0
          %2224 = vmatprep.subr.mxu0 0.0
          %2225 = vmatpush1.msra.mxu0 0.0
          %2226 = vmatprep.subr.mxu0 0.0
          %2227 = vmatpush1.msra.mxu0 0.0
          %2228 = vmatprep.subr.mxu0 0.0
          %2229 = vmatpush1.msra.mxu0 0.0
          %2230 = vmatprep.subr.mxu0 0.0
          %2231 = vmatpush1.msra.mxu0 0.0
          %2232 = vmatprep.subr.mxu0 0.0
          %2233 = vmatpush1.msra.mxu0 0.0
          %2234 = vmatprep.subr.mxu0 0.0
          %2235 = vmatpush1.msra.mxu0 0.0
          %2236 = vmatprep.subr.mxu0 0.0
          %2237 = vmatpush1.msra.mxu0 0.0
          %2238 = vmatprep.subr.mxu0 0.0
          %2239 = vmatpush1.msra.mxu0 0.0
          %2240 = vmatprep.subr.mxu0 0.0
          %2241 = vmatpush1.msra.mxu0 0.0
          %2242 = vmatprep.subr.mxu0 0.0
          %2243 = vmatpush1.msra.mxu0 0.0
          %2244 = vmatprep.subr.mxu0 0.0
          %2245 = vmatpush1.msra.mxu0 0.0
          %2246 = vmatprep.subr.mxu0 0.0
          %2247 = vmatpush1.msra.mxu0 0.0
          %2248 = vmatprep.mubr.f32.mxu0 0.0
          %v2249 = vand.u32 %v2180, 4294901760
          %v2250 = vsub.f32 %v2180, %v2249
          %v2251 = vand.u32 %v2250, 4294901760
          %v2252 = vsub.f32 %v2250, %v2251
          %v2253 = vand.u32 %v2252, 4294901760
          %2254 = vmatmul.mubr.f32.gmra.mrb[0].mxu0 %v2253
          %v2255 = vpop.f32.mrb[0].mxu0
          %v2256 = vadd.f32 0.0, %v2255
          %v2257 = vpop.f32.mrb[0].mxu0
          %v2258 = vadd.f32 0.0, %v2257
          %2259 = vdwg.mxu0
          %v2260 = vand.u32 %v2177, 4294901760
          %v2261 = vsub.f32 %v2177, %v2260
          %v2262 = vand.u32 %v2261, 4294901760
          %v2263 = vsub.f32 %v2261, %v2262
          %v2264 = vand.u32 %v2263, 4294901760
          %2265 = vmatprep.subr.mxu0 %v2264
          %v2266 = vand.u32 %v2176, 4294901760
          %v2267 = vsub.f32 %v2176, %v2266
          %v2268 = vand.u32 %v2267, 4294901760
          %v2269 = vsub.f32 %v2267, %v2268
          %v2270 = vand.u32 %v2269, 4294901760
          %2271 = vmatpush1.msra.mxu0 %v2270
          %2272 = vmatprep.subr.mxu0 0.0
          %2273 = vmatpush1.msra.mxu0 0.0
          %2274 = vmatprep.subr.mxu0 0.0
          %2275 = vmatpush1.msra.mxu0 0.0
          %2276 = vmatprep.subr.mxu0 0.0
          %2277 = vmatpush1.msra.mxu0 0.0
          %2278 = vmatprep.subr.mxu0 0.0
          %2279 = vmatpush1.msra.mxu0 0.0
          %2280 = vmatprep.subr.mxu0 0.0
          %2281 = vmatpush1.msra.mxu0 0.0
          %2282 = vmatprep.subr.mxu0 0.0
          %2283 = vmatpush1.msra.mxu0 0.0
          %2284 = vmatprep.subr.mxu0 0.0
          %2285 = vmatpush1.msra.mxu0 0.0
          %2286 = vmatprep.subr.mxu0 0.0
          %2287 = vmatpush1.msra.mxu0 0.0
          %2288 = vmatprep.subr.mxu0 0.0
          %2289 = vmatpush1.msra.mxu0 0.0
          %2290 = vmatprep.subr.mxu0 0.0
          %2291 = vmatpush1.msra.mxu0 0.0
          %2292 = vmatprep.subr.mxu0 0.0
          %2293 = vmatpush1.msra.mxu0 0.0
          %2294 = vmatprep.subr.mxu0 0.0
          %2295 = vmatpush1.msra.mxu0 0.0
          %2296 = vmatprep.subr.mxu0 0.0
          %2297 = vmatpush1.msra.mxu0 0.0
          %2298 = vmatprep.subr.mxu0 0.0
          %2299 = vmatpush1.msra.mxu0 0.0
          %2300 = vmatprep.subr.mxu0 0.0
          %2301 = vmatpush1.msra.mxu0 0.0
          %2302 = vmatprep.subr.mxu0 0.0
          %2303 = vmatpush1.msra.mxu0 0.0
          %2304 = vmatprep.subr.mxu0 0.0
          %2305 = vmatpush1.msra.mxu0 0.0
          %2306 = vmatprep.subr.mxu0 0.0
          %2307 = vmatpush1.msra.mxu0 0.0
          %2308 = vmatprep.subr.mxu0 0.0
          %2309 = vmatpush1.msra.mxu0 0.0
          %2310 = vmatprep.subr.mxu0 0.0
          %2311 = vmatpush1.msra.mxu0 0.0
          %2312 = vmatprep.subr.mxu0 0.0
          %2313 = vmatpush1.msra.mxu0 0.0
          %2314 = vmatprep.subr.mxu0 0.0
          %2315 = vmatpush1.msra.mxu0 0.0
          %2316 = vmatprep.subr.mxu0 0.0
          %2317 = vmatpush1.msra.mxu0 0.0
          %2318 = vmatprep.subr.mxu0 0.0
          %2319 = vmatpush1.msra.mxu0 0.0
          %2320 = vmatprep.subr.mxu0 0.0
          %2321 = vmatpush1.msra.mxu0 0.0
          %2322 = vmatprep.subr.mxu0 0.0
          %2323 = vmatpush1.msra.mxu0 0.0
          %2324 = vmatprep.subr.mxu0 0.0
          %2325 = vmatpush1.msra.mxu0 0.0
          %2326 = vmatprep.subr.mxu0 0.0
          %2327 = vmatpush1.msra.mxu0 0.0
          %2328 = vmatprep.subr.mxu0 0.0
          %2329 = vmatpush1.msra.mxu0 0.0
          %2330 = vmatprep.subr.mxu0 0.0
          %2331 = vmatpush1.msra.mxu0 0.0
          %2332 = vmatprep.subr.mxu0 0.0
          %2333 = vmatpush1.msra.mxu0 0.0
          %2334 = vmatprep.mubr.f32.mxu0 0.0
          %v2335 = vand.u32 %v2180, 4294901760
          %2336 = vmatmul.mubr.f32.gmra.mrb[0].mxu0 %v2335
          %v2337 = vpop.f32.mrb[0].mxu0
          %v2338 = vadd.f32 %v2256, %v2337
          %v2339 = vpop.f32.mrb[0].mxu0
          %v2340 = vadd.f32 %v2258, %v2339
          %2341 = vdwg.mxu0
          %v2342 = vand.u32 %v2177, 4294901760
          %v2343 = vsub.f32 %v2177, %v2342
          %2344 = vmatprep.subr.mxu0 %v2343
          %v2345 = vand.u32 %v2176, 4294901760
          %v2346 = vsub.f32 %v2176, %v2345
          %2347 = vmatpush1.msra.mxu0 %v2346
          %2348 = vmatprep.subr.mxu0 0.0
          %2349 = vmatpush1.msra.mxu0 0.0
          %2350 = vmatprep.subr.mxu0 0.0
          %2351 = vmatpush1.msra.mxu0 0.0
          %2352 = vmatprep.subr.mxu0 0.0
          %2353 = vmatpush1.msra.mxu0 0.0
          %2354 = vmatprep.subr.mxu0 0.0
          %2355 = vmatpush1.msra.mxu0 0.0
          %2356 = vmatprep.subr.mxu0 0.0
          %2357 = vmatpush1.msra.mxu0 0.0
          %2358 = vmatprep.subr.mxu0 0.0
          %2359 = vmatpush1.msra.mxu0 0.0
          %2360 = vmatprep.subr.mxu0 0.0
          %2361 = vmatpush1.msra.mxu0 0.0
          %2362 = vmatprep.subr.mxu0 0.0
          %2363 = vmatpush1.msra.mxu0 0.0
          %2364 = vmatprep.subr.mxu0 0.0
          %2365 = vmatpush1.msra.mxu0 0.0
          %2366 = vmatprep.subr.mxu0 0.0
          %2367 = vmatpush1.msra.mxu0 0.0
          %2368 = vmatprep.subr.mxu0 0.0
          %2369 = vmatpush1.msra.mxu0 0.0
          %2370 = vmatprep.subr.mxu0 0.0
          %2371 = vmatpush1.msra.mxu0 0.0
          %2372 = vmatprep.subr.mxu0 0.0
          %2373 = vmatpush1.msra.mxu0 0.0
          %2374 = vmatprep.subr.mxu0 0.0
          %2375 = vmatpush1.msra.mxu0 0.0
          %2376 = vmatprep.subr.mxu0 0.0
          %2377 = vmatpush1.msra.mxu0 0.0
          %2378 = vmatprep.subr.mxu0 0.0
          %2379 = vmatpush1.msra.mxu0 0.0
          %2380 = vmatprep.subr.mxu0 0.0
          %2381 = vmatpush1.msra.mxu0 0.0
          %2382 = vmatprep.subr.mxu0 0.0
          %2383 = vmatpush1.msra.mxu0 0.0
          %2384 = vmatprep.subr.mxu0 0.0
          %2385 = vmatpush1.msra.mxu0 0.0
          %2386 = vmatprep.subr.mxu0 0.0
          %2387 = vmatpush1.msra.mxu0 0.0
          %2388 = vmatprep.subr.mxu0 0.0
          %2389 = vmatpush1.msra.mxu0 0.0
          %2390 = vmatprep.subr.mxu0 0.0
          %2391 = vmatpush1.msra.mxu0 0.0
          %2392 = vmatprep.subr.mxu0 0.0
          %2393 = vmatpush1.msra.mxu0 0.0
          %2394 = vmatprep.subr.mxu0 0.0
          %2395 = vmatpush1.msra.mxu0 0.0
          %2396 = vmatprep.subr.mxu0 0.0
          %2397 = vmatpush1.msra.mxu0 0.0
          %2398 = vmatprep.subr.mxu0 0.0
          %2399 = vmatpush1.msra.mxu0 0.0
          %2400 = vmatprep.subr.mxu0 0.0
          %2401 = vmatpush1.msra.mxu0 0.0
          %2402 = vmatprep.subr.mxu0 0.0
          %2403 = vmatpush1.msra.mxu0 0.0
          %2404 = vmatprep.subr.mxu0 0.0
          %2405 = vmatpush1.msra.mxu0 0.0
          %2406 = vmatprep.subr.mxu0 0.0
          %2407 = vmatpush1.msra.mxu0 0.0
          %2408 = vmatprep.subr.mxu0 0.0
          %2409 = vmatpush1.msra.mxu0 0.0
          %2410 = vmatprep.mubr.f32.mxu0 0.0
          %v2411 = vand.u32 %v2180, 4294901760
          %v2412 = vsub.f32 %v2180, %v2411
          %2413 = vmatmul.mubr.f32.gmra.mrb[0].mxu0 %v2412
          %v2414 = vpop.f32.mrb[0].mxu0
          %v2415 = vadd.f32 %v2338, %v2414
          %v2416 = vpop.f32.mrb[0].mxu0
          %v2417 = vadd.f32 %v2340, %v2416
          %2418 = vdwg.mxu0
          %v2419 = vand.u32 %v2177, 4294901760
          %2420 = vmatprep.subr.mxu0 %v2419
          %v2421 = vand.u32 %v2176, 4294901760
          %2422 = vmatpush1.msra.mxu0 %v2421
          %2423 = vmatprep.subr.mxu0 0.0
          %2424 = vmatpush1.msra.mxu0 0.0
          %2425 = vmatprep.subr.mxu0 0.0
          %2426 = vmatpush1.msra.mxu0 0.0
          %2427 = vmatprep.subr.mxu0 0.0
          %2428 = vmatpush1.msra.mxu0 0.0
          %2429 = vmatprep.subr.mxu0 0.0
          %2430 = vmatpush1.msra.mxu0 0.0
          %2431 = vmatprep.subr.mxu0 0.0
          %2432 = vmatpush1.msra.mxu0 0.0
          %2433 = vmatprep.subr.mxu0 0.0
          %2434 = vmatpush1.msra.mxu0 0.0
          %2435 = vmatprep.subr.mxu0 0.0
          %2436 = vmatpush1.msra.mxu0 0.0
          %2437 = vmatprep.subr.mxu0 0.0
          %2438 = vmatpush1.msra.mxu0 0.0
          %2439 = vmatprep.subr.mxu0 0.0
          %2440 = vmatpush1.msra.mxu0 0.0
          %2441 = vmatprep.subr.mxu0 0.0
          %2442 = vmatpush1.msra.mxu0 0.0
          %2443 = vmatprep.subr.mxu0 0.0
          %2444 = vmatpush1.msra.mxu0 0.0
          %2445 = vmatprep.subr.mxu0 0.0
          %2446 = vmatpush1.msra.mxu0 0.0
          %2447 = vmatprep.subr.mxu0 0.0
          %2448 = vmatpush1.msra.mxu0 0.0
          %2449 = vmatprep.subr.mxu0 0.0
          %2450 = vmatpush1.msra.mxu0 0.0
          %2451 = vmatprep.subr.mxu0 0.0
          %2452 = vmatpush1.msra.mxu0 0.0
          %2453 = vmatprep.subr.mxu0 0.0
          %2454 = vmatpush1.msra.mxu0 0.0
          %2455 = vmatprep.subr.mxu0 0.0
          %2456 = vmatpush1.msra.mxu0 0.0
          %2457 = vmatprep.subr.mxu0 0.0
          %2458 = vmatpush1.msra.mxu0 0.0
          %2459 = vmatprep.subr.mxu0 0.0
          %2460 = vmatpush1.msra.mxu0 0.0
          %2461 = vmatprep.subr.mxu0 0.0
          %2462 = vmatpush1.msra.mxu0 0.0
          %2463 = vmatprep.subr.mxu0 0.0
          %2464 = vmatpush1.msra.mxu0 0.0
          %2465 = vmatprep.subr.mxu0 0.0
          %2466 = vmatpush1.msra.mxu0 0.0
          %2467 = vmatprep.subr.mxu0 0.0
          %2468 = vmatpush1.msra.mxu0 0.0
          %2469 = vmatprep.subr.mxu0 0.0
          %2470 = vmatpush1.msra.mxu0 0.0
          %2471 = vmatprep.subr.mxu0 0.0
          %2472 = vmatpush1.msra.mxu0 0.0
          %2473 = vmatprep.subr.mxu0 0.0
          %2474 = vmatpush1.msra.mxu0 0.0
          %2475 = vmatprep.subr.mxu0 0.0
          %2476 = vmatpush1.msra.mxu0 0.0
          %2477 = vmatprep.subr.mxu0 0.0
          %2478 = vmatpush1.msra.mxu0 0.0
          %2479 = vmatprep.subr.mxu0 0.0
          %2480 = vmatpush1.msra.mxu0 0.0
          %2481 = vmatprep.subr.mxu0 0.0
          %2482 = vmatpush1.msra.mxu0 0.0
          %2483 = vmatprep.subr.mxu0 0.0
          %2484 = vmatpush1.msra.mxu0 0.0
          %2485 = vmatprep.mubr.f32.mxu0 0.0
          %v2486 = vand.u32 %v2180, 4294901760
          %v2487 = vsub.f32 %v2180, %v2486
          %v2488 = vand.u32 %v2487, 4294901760
          %2489 = vmatmul.mubr.f32.gmra.mrb[0].mxu0 %v2488
          %v2490 = vpop.f32.mrb[0].mxu0
          %v2491 = vadd.f32 %v2415, %v2490
          %v2492 = vpop.f32.mrb[0].mxu0
          %v2493 = vadd.f32 %v2417, %v2492
          %2494 = vdwg.mxu0
          %v2495 = vand.u32 %v2177, 4294901760
          %v2496 = vsub.f32 %v2177, %v2495
          %v2497 = vand.u32 %v2496, 4294901760
          %2498 = vmatprep.subr.mxu0 %v2497
          %v2499 = vand.u32 %v2176, 4294901760
          %v2500 = vsub.f32 %v2176, %v2499
          %v2501 = vand.u32 %v2500, 4294901760
          %2502 = vmatpush1.msra.mxu0 %v2501
          %2503 = vmatprep.subr.mxu0 0.0
          %2504 = vmatpush1.msra.mxu0 0.0
          %2505 = vmatprep.subr.mxu0 0.0
          %2506 = vmatpush1.msra.mxu0 0.0
          %2507 = vmatprep.subr.mxu0 0.0
          %2508 = vmatpush1.msra.mxu0 0.0
          %2509 = vmatprep.subr.mxu0 0.0
          %2510 = vmatpush1.msra.mxu0 0.0
          %2511 = vmatprep.subr.mxu0 0.0
          %2512 = vmatpush1.msra.mxu0 0.0
          %2513 = vmatprep.subr.mxu0 0.0
          %2514 = vmatpush1.msra.mxu0 0.0
          %2515 = vmatprep.subr.mxu0 0.0
          %2516 = vmatpush1.msra.mxu0 0.0
          %2517 = vmatprep.subr.mxu0 0.0
          %2518 = vmatpush1.msra.mxu0 0.0
          %2519 = vmatprep.subr.mxu0 0.0
          %2520 = vmatpush1.msra.mxu0 0.0
          %2521 = vmatprep.subr.mxu0 0.0
          %2522 = vmatpush1.msra.mxu0 0.0
          %2523 = vmatprep.subr.mxu0 0.0
          %2524 = vmatpush1.msra.mxu0 0.0
          %2525 = vmatprep.subr.mxu0 0.0
          %2526 = vmatpush1.msra.mxu0 0.0
          %2527 = vmatprep.subr.mxu0 0.0
          %2528 = vmatpush1.msra.mxu0 0.0
          %2529 = vmatprep.subr.mxu0 0.0
          %2530 = vmatpush1.msra.mxu0 0.0
          %2531 = vmatprep.subr.mxu0 0.0
          %2532 = vmatpush1.msra.mxu0 0.0
          %2533 = vmatprep.subr.mxu0 0.0
          %2534 = vmatpush1.msra.mxu0 0.0
          %2535 = vmatprep.subr.mxu0 0.0
          %2536 = vmatpush1.msra.mxu0 0.0
          %2537 = vmatprep.subr.mxu0 0.0
          %2538 = vmatpush1.msra.mxu0 0.0
          %2539 = vmatprep.subr.mxu0 0.0
          %2540 = vmatpush1.msra.mxu0 0.0
          %2541 = vmatprep.subr.mxu0 0.0
          %2542 = vmatpush1.msra.mxu0 0.0
          %2543 = vmatprep.subr.mxu0 0.0
          %2544 = vmatpush1.msra.mxu0 0.0
          %2545 = vmatprep.subr.mxu0 0.0
          %2546 = vmatpush1.msra.mxu0 0.0
          %2547 = vmatprep.subr.mxu0 0.0
          %2548 = vmatpush1.msra.mxu0 0.0
          %2549 = vmatprep.subr.mxu0 0.0
          %2550 = vmatpush1.msra.mxu0 0.0
          %2551 = vmatprep.subr.mxu0 0.0
          %2552 = vmatpush1.msra.mxu0 0.0
          %2553 = vmatprep.subr.mxu0 0.0
          %2554 = vmatpush1.msra.mxu0 0.0
          %2555 = vmatprep.subr.mxu0 0.0
          %2556 = vmatpush1.msra.mxu0 0.0
          %2557 = vmatprep.subr.mxu0 0.0
          %2558 = vmatpush1.msra.mxu0 0.0
          %2559 = vmatprep.subr.mxu0 0.0
          %2560 = vmatpush1.msra.mxu0 0.0
          %2561 = vmatprep.subr.mxu0 0.0
          %2562 = vmatpush1.msra.mxu0 0.0
          %2563 = vmatprep.subr.mxu0 0.0
          %2564 = vmatpush1.msra.mxu0 0.0
          %2565 = vmatprep.mubr.f32.mxu0 0.0
          %v2566 = vand.u32 %v2180, 4294901760
          %2567 = vmatmul.mubr.f32.gmra.mrb[0].mxu0 %v2566
          %v2568 = vpop.f32.mrb[0].mxu0
          %v2569 = vadd.f32 %v2491, %v2568
          %v2570 = vpop.f32.mrb[0].mxu0
          %v2571 = vadd.f32 %v2493, %v2570
          %2572 = vdwg.mxu0
          %v2573 = vand.u32 %v2177, 4294901760
          %2574 = vmatprep.subr.mxu0 %v2573
          %v2575 = vand.u32 %v2176, 4294901760
          %2576 = vmatpush1.msra.mxu0 %v2575
          %2577 = vmatprep.subr.mxu0 0.0
          %2578 = vmatpush1.msra.mxu0 0.0
          %2579 = vmatprep.subr.mxu0 0.0
          %2580 = vmatpush1.msra.mxu0 0.0
          %2581 = vmatprep.subr.mxu0 0.0
          %2582 = vmatpush1.msra.mxu0 0.0
          %2583 = vmatprep.subr.mxu0 0.0
          %2584 = vmatpush1.msra.mxu0 0.0
          %2585 = vmatprep.subr.mxu0 0.0
          %2586 = vmatpush1.msra.mxu0 0.0
          %2587 = vmatprep.subr.mxu0 0.0
          %2588 = vmatpush1.msra.mxu0 0.0
          %2589 = vmatprep.subr.mxu0 0.0
          %2590 = vmatpush1.msra.mxu0 0.0
          %2591 = vmatprep.subr.mxu0 0.0
          %2592 = vmatpush1.msra.mxu0 0.0
          %2593 = vmatprep.subr.mxu0 0.0
          %2594 = vmatpush1.msra.mxu0 0.0
          %2595 = vmatprep.subr.mxu0 0.0
          %2596 = vmatpush1.msra.mxu0 0.0
          %2597 = vmatprep.subr.mxu0 0.0
          %2598 = vmatpush1.msra.mxu0 0.0
          %2599 = vmatprep.subr.mxu0 0.0
          %2600 = vmatpush1.msra.mxu0 0.0
          %2601 = vmatprep.subr.mxu0 0.0
          %2602 = vmatpush1.msra.mxu0 0.0
          %2603 = vmatprep.subr.mxu0 0.0
          %2604 = vmatpush1.msra.mxu0 0.0
          %2605 = vmatprep.subr.mxu0 0.0
          %2606 = vmatpush1.msra.mxu0 0.0
          %2607 = vmatprep.subr.mxu0 0.0
          %2608 = vmatpush1.msra.mxu0 0.0
          %2609 = vmatprep.subr.mxu0 0.0
          %2610 = vmatpush1.msra.mxu0 0.0
          %2611 = vmatprep.subr.mxu0 0.0
          %2612 = vmatpush1.msra.mxu0 0.0
          %2613 = vmatprep.subr.mxu0 0.0
          %2614 = vmatpush1.msra.mxu0 0.0
          %2615 = vmatprep.subr.mxu0 0.0
          %2616 = vmatpush1.msra.mxu0 0.0
          %2617 = vmatprep.subr.mxu0 0.0
          %2618 = vmatpush1.msra.mxu0 0.0
          %2619 = vmatprep.subr.mxu0 0.0
          %2620 = vmatpush1.msra.mxu0 0.0
          %2621 = vmatprep.subr.mxu0 0.0
          %2622 = vmatpush1.msra.mxu0 0.0
          %2623 = vmatprep.subr.mxu0 0.0
          %2624 = vmatpush1.msra.mxu0 0.0
          %2625 = vmatprep.subr.mxu0 0.0
          %2626 = vmatpush1.msra.mxu0 0.0
          %2627 = vmatprep.subr.mxu0 0.0
          %2628 = vmatpush1.msra.mxu0 0.0
          %2629 = vmatprep.subr.mxu0 0.0
          %2630 = vmatpush1.msra.mxu0 0.0
          %2631 = vmatprep.subr.mxu0 0.0
          %2632 = vmatpush1.msra.mxu0 0.0
          %2633 = vmatprep.subr.mxu0 0.0
          %2634 = vmatpush1.msra.mxu0 0.0
          %2635 = vmatprep.subr.mxu0 0.0
          %2636 = vmatpush1.msra.mxu0 0.0
          %2637 = vmatprep.subr.mxu0 0.0
          %2638 = vmatpush1.msra.mxu0 0.0
          %2639 = vmatprep.mubr.f32.mxu0 0.0
          %v2640 = vand.u32 %v2180, 4294901760
          %2641 = vmatmul.mubr.f32.gmra.mrb[0].mxu0 %v2640
          %v2642 = vpop.f32.mrb[0].mxu0
          %v2643 = vadd.f32 %v2569, %v2642
          %v2644 = vpop.f32.mrb[0].mxu0
          %v2645 = vadd.f32 %v2571, %v2644
          %2646 = vdwg.mxu0
          %2648 = vset.pattern.permute.xlu0 5
          %2649 = vperm.xlu0 %2648, %v246
          %v2650 = vpop.permute.xlu0 %2649
          %v2652 = vadd.f32 %v2643, %v2650
          %v2653 = vadd.f32 %v2645, %v2650
          %v2656 = vcombine.low %v2652, %v2653
          %v2658 = vunpack.c.l.s4 1966171168
          %v2659 = vunpack.c.0.s8 %v2658
          %v2660 = vlaneseq
          %v2661 = vshrl.u32 %v2660, 7
          %v2662 = vsub.s32 %v2659, %v2661
          %v2663 = vrot.slane %v2656, %v2662
          %v2665 = vunpack.c.l.s4 1966171168
          %v2666 = vunpack.c.0.s8 %v2665
          %v2667 = vlaneseq
          %v2668 = vshrl.u32 %v2667, 7
          %v2669 = vsub.s32 %v2666, %v2668
          %v2670 = vrot.slane %v2663, %v2669
          %s2672 = scalar_lea.vmem %s211, %s254 [#allocation8]
          %v2673 = vlaneseq
          %vm2674 = vcmp.ge.s32.totalorder %v2673, 0
          %vm2675 = vcmp.lt.s32.totalorder %v2673, 256
          %vm2676 = vmand %vm2674, %vm2675
          %2677 = vst.msk [vmem:[%s2672] sm:$0x3] %vm2676, %v2670
        $region49: #{tpu_custom_call.1} parent=31 // loop_footer
          %s252 = sadd.s32 1, %s248
        $region50: #{tpu_custom_call.1} parent=31 // loop_footer_branch
          %247 = sbr.rel target = $region46
        $region51: #{tpu_custom_call.1} parent=31 // loop_exit
          _
        %s2678 = sand.u32 %s97, 1
        %s2679 = scalar_lea.sflag [#allocation4], %s2678
        %s2680 = sand.u32 %s97, 1
        %s2681 = smul.addr %s2680, 4
        %s2682 = scalar_lea.vmem [#allocation8], %s2681
        // Predicated region
        $region52: #{tpu_custom_call.1} parent=31 // pred_check
          %p2683 = pneg %p107
        $region53: #{tpu_custom_call.1} parent=31 // pred_check_branch
          %2685 = sbr.rel (%p2683) target = $region55
        $region54: #{tpu_custom_call.1} parent=31 // pred_region
          %s2686 = smul.u32 4, %s21
          %s2688 = ssub.s32 64, 64
          %2689 = vsyncadd %s2679, %s2688
          %s2690 = smul.addr %s2686, 16
          %s2691 = scalar_lea.hbm %s3, %s2690
          %s2693 = sshll.u32 %s2682, 4
          %s2694 = int_to_ptr.vmem [resolvable:$true] %s2693
          %2696 = dma.vmem_to_hbm [thread:$0]  %s2694, 64, %s2691, %s2679
        $region55: #{tpu_custom_call.1} parent=31 // pred_fallthru
          _
      $region32: #{tpu_custom_call.1} parent=5 // pred_fallthru
        _
      %p2697 = scmp.le.s32.totalorder 2, %s16
      // Predicated region
      $region56: #{tpu_custom_call.1} parent=5 // pred_check
        %p2698 = pneg %p2697
      $region57: #{tpu_custom_call.1} parent=5 // pred_check_branch
        %2700 = sbr.rel (%p2698) target = $region59
      $region58: #{tpu_custom_call.1} parent=5 // pred_region
        %s2701 = ssub.s32 %s16, 2
        // Predicated region
        $region60: #{tpu_custom_call.1} parent=58 // pred_check
          %p2702 = pneg %p113
        $region61: #{tpu_custom_call.1} parent=58 // pred_check_branch
          %2704 = sbr.rel (%p2702) target = $region63
        $region62: #{tpu_custom_call.1} parent=58 // pred_region
          %s2705 = sand.u32 %s98, 1
          %s2706 = scalar_lea.sflag [#allocation4], %s2705
          %s2707 = sand.u32 %s98, 1
          %s2708 = smul.addr %s2707, 4
          %s2709 = scalar_lea.vmem [#allocation8], %s2708
          %2710 = dma.done %s2706, 64
        $region63: #{tpu_custom_call.1} parent=58 // pred_fallthru
          _
      $region59: #{tpu_custom_call.1} parent=5 // pred_fallthru
        _
    $region6: #{tpu_custom_call.1} parent=1 // loop_footer
      %s20 = sadd.s32 1, %s16
    $region7: #{tpu_custom_call.1} parent=1 // loop_footer_branch
      %15 = sbr.rel target = $region3
    $region8: #{tpu_custom_call.1} parent=1 // loop_exit
      _
    %2711 = vsyncpa [#allocation3], 1
    %s2712 = scalar_lea.sflag [#allocation3], 1
    %2713 = vsyncpa %s2712, 1
    %2714 = vsyncpa [#allocation6], 1
    %2715 = vsyncpa [#allocation4], 1
    %s2716 = scalar_lea.sflag [#allocation4], 1
    %2717 = vsyncpa %s2716, 1

</llo_original>
